<compile_context>
chip_gen: v7x
topology: tpu7x:2x2x1
jax: 0.10.0
libtpu: 0.0.40
codegen_flags: <defaults>
</compile_context>

<pallas_src>
import math

import jax
import jax.numpy as jnp
from jax.experimental import pallas as pl
from jax.experimental.pallas import tpu as pltpu


_CHUNK_ROWS = 64  # rows per inner chunk: 64 x 128 f32 = 8 vregs for the acc


def _clut4d_kernel(w_ref, lut_ref, id_ref, o_ref):
    """One lane-dense F-tile of the fused LUT.

    w_ref  : SMEM (B, num)          tiny weight matrix, read as scalars
    lut_ref: VMEM (num, tfr, 128)   one F-tile of the LUT atoms
    id_ref : VMEM (tfr, 128)        matching tile of the identity LUT
    o_ref  : VMEM (B, tfr, 128)
    """
    batch = o_ref.shape[0]
    num = lut_ref.shape[0]
    tile_rows = o_ref.shape[1]

    for b in range(batch):                       # static unroll (batch tiny)
        # Hoist the scalar SMEM reads for this batch row (sregs, ~free).
        wk = [w_ref[b, k] for k in range(num)]
        # Row-chunked broadcast-FMA reduction over the atoms (VPU only).
        for c0 in range(0, tile_rows, _CHUNK_ROWS):
            rows = min(_CHUNK_ROWS, tile_rows - c0)      # static (mult of 8)
            sl = pl.ds(c0, rows)
            acc = id_ref[sl, :].astype(jnp.float32)      # f32 accumulator
            for k in range(num):                 # static unroll (num tiny)
                acc = acc + wk[k] * lut_ref[k, sl, :].astype(jnp.float32)
            o_ref[b, sl, :] = jnp.clip(acc, 0.0, 1.0).astype(o_ref.dtype)


def clut4d_prepare(luts, identity_lut, *, num_f_tiles=1, storage_dtype=None):
    """One-time lane-dense relayout of the LUT parameter + identity LUT.

    In real use call this at parameter-update time (outside the hot path).

    Args:
      luts:          (num, 3, ncb, dim, dim, dim)
      identity_lut:  (3, ncb, dim, dim, dim)
      num_f_tiles:   number of F-tiles the kernel grid will use.
      storage_dtype: optional (e.g. jnp.bfloat16) to halve HBM traffic; the
                     kernel always accumulates in f32.
    Returns:
      luts_dense (num, rows, 128), id_dense (rows, 128), lut_shape tuple.
    """
    num = luts.shape[0]
    lut_shape = tuple(luts.shape[1:])
    assert tuple(identity_lut.shape) == lut_shape
    F = math.prod(lut_shape)

    # rows: cdiv(F, 128) rounded to a multiple of 8 * num_f_tiles so every
    # block's trailing dims are (multiple of 8, 128) -- no masked edge blocks.
    rows = pl.cdiv(pl.cdiv(F, 128), 8 * num_f_tiles) * 8 * num_f_tiles
    Fp = rows * 128

    luts_flat = luts.reshape(num, F)
    id_flat = identity_lut.reshape(F)
    if Fp != F:
        luts_flat = jnp.pad(luts_flat, ((0, 0), (0, Fp - F)))
        id_flat = jnp.pad(id_flat, (0, Fp - F))
    luts_dense = luts_flat.reshape(num, rows, 128)
    id_dense = id_flat.reshape(rows, 128)
    if storage_dtype is not None:
        luts_dense = luts_dense.astype(storage_dtype)
        id_dense = id_dense.astype(storage_dtype)
    return luts_dense, id_dense, lut_shape


def clut4d_combine_dense(weight, luts_dense, id_dense, lut_shape,
                         *, num_f_tiles=1):
    """Hot path: pallas_call on the pre-laid-out LUT atoms."""
    B, num = weight.shape
    num_, rows, lanes = luts_dense.shape
    assert num_ == num and lanes == 128 and rows % (8 * num_f_tiles) == 0
    tile_rows = rows // num_f_tiles
    F = math.prod(lut_shape)

    cost = pl.CostEstimate(
        flops=2 * B * num * rows * 128,
        transcendentals=0,
        bytes_accessed=(weight.size * weight.dtype.itemsize
                        + luts_dense.size * luts_dense.dtype.itemsize
                        + id_dense.size * id_dense.dtype.itemsize
                        + 4 * B * rows * 128),
    )

    out_dense = pl.pallas_call(
        _clut4d_kernel,
        out_shape=jax.ShapeDtypeStruct((B, rows, 128), jnp.float32),
        grid_spec=pltpu.PrefetchScalarGridSpec(
            num_scalar_prefetch=0,
            grid=(num_f_tiles,),
            in_specs=[
                # Tiny weight matrix: whole array in SMEM, scalar reads.
                pl.BlockSpec(memory_space=pltpu.MemorySpace.SMEM),
                # LUT atoms / identity / output: lane-dense F tiles.
                pl.BlockSpec((num, tile_rows, 128), lambda j: (0, j, 0)),
                pl.BlockSpec((tile_rows, 128), lambda j: (j, 0)),
            ],
            out_specs=pl.BlockSpec((B, tile_rows, 128), lambda j: (0, j, 0)),
        ),
        compiler_params=pltpu.CompilerParams(
            dimension_semantics=("parallel",)),
        cost_estimate=cost,
    )(weight, luts_dense, id_dense)

    # Strip the lane padding and restore the (B, 3, ncb, dim, dim, dim) view.
    fused = out_dense.reshape(B, rows * 128)[:, :F]
    return fused.reshape((B,) + lut_shape)


def clut4d_forward(weight, luts, identity_lut, *, num_f_tiles=1,
                   storage_dtype=None):
    """Pallas implementation of CLUT4D.forward.

    Args:
      weight:       (B, num) float32 predicted weights.
      luts:         (num, 3, ncb, dim, dim, dim) float32 parameter.
      identity_lut: (3, ncb, dim, dim, dim) float32.
      num_f_tiles:  1 (default, best on v6e/v7x); 2-4 can overlap DMA with
                    compute on v5e's slower HBM.
    Returns:
      fused_lut (B, 3, ncb, dim, dim, dim), tvmn (=0)
    """
    luts_dense, id_dense, lut_shape = clut4d_prepare(
        luts, identity_lut, num_f_tiles=num_f_tiles,
        storage_dtype=storage_dtype)
    fused = clut4d_combine_dense(weight, luts_dense, id_dense, lut_shape,
                                 num_f_tiles=num_f_tiles)
    tvmn = 0  # TODO(synk): tvmn_module (TV/monotonicity loss) not provided; reference returns 0 when it is None.
    return fused, tvmn


def make_identity_lut(dim, num_context_bins, dtype=jnp.float32):
    """Deterministic identity 4D LUT: channel c copies the c-th color axis
    coordinate (in [0, 1]), independent of the context bin."""
    ramp = jnp.linspace(0.0, 1.0, dim, dtype=dtype)
    ch_r = jnp.broadcast_to(ramp[None, None, None, :],
                            (num_context_bins, dim, dim, dim))
    ch_g = jnp.broadcast_to(ramp[None, None, :, None],
                            (num_context_bins, dim, dim, dim))
    ch_b = jnp.broadcast_to(ramp[None, :, None, None],
                            (num_context_bins, dim, dim, dim))
    return jnp.stack([ch_r, ch_g, ch_b], axis=0)  # (3, ncb, dim, dim, dim)


if __name__ == "__main__":
    key = jax.random.PRNGKey(0)
    k_lut, k_w = jax.random.split(key)

    # CLUT4D defaults, small atom count / batch.
    num, dim, ncb = 8, 17, 2
    batch = 2

    # nn.init.uniform_(LUTs, -0.1, 0.1) -> deterministic uniform init here.
    luts = jax.random.uniform(
        k_lut, (num, 3, ncb, dim, dim, dim), minval=-0.1, maxval=0.1,
        dtype=jnp.float32)
    weight = jax.random.normal(k_w, (batch, num), dtype=jnp.float32) * 0.2
    identity_lut = make_identity_lut(dim, ncb)

    # Default single full-extent block (v5e/v6e/v7x).
    fused_lut, tvmn = clut4d_forward(weight, luts, identity_lut)
    fused_lut = jax.block_until_ready(fused_lut)

    # Two F-tile path (DMA/compute overlap option for v5e) exercised as well.
    fused_lut_2t, _ = clut4d_forward(weight, luts, identity_lut, num_f_tiles=2)
    fused_lut_2t = jax.block_until_ready(fused_lut_2t)

    # Pure-JAX reference check.
    ref = jnp.matmul(weight, luts.reshape(num, -1)).reshape(
        batch, 3, ncb, dim, dim, dim)
    ref = jnp.clip(ref + identity_lut[None], 0.0, 1.0)
    assert fused_lut.shape == (batch, 3, ncb, dim, dim, dim)
    assert jnp.allclose(fused_lut, ref, atol=1e-5, rtol=1e-5)
    assert jnp.allclose(fused_lut_2t, ref, atol=1e-5, rtol=1e-5)

    print("KERNEL_OK")
</pallas_src>

<mosaic_0001>
module attributes {stable_mosaic.version = 11 : i64} {
  func.func @_clut4d_kernel(%arg0: i32, %arg1: memref<2x8xf32, #tpu.memory_space<smem>>, %arg2: memref<8x232x128xf32, #tpu.memory_space<vmem>>, %arg3: memref<232x128xf32, #tpu.memory_space<vmem>>, %arg4: memref<2x232x128xf32, #tpu.memory_space<vmem>>) attributes {dimension_semantics = [#tpu.dimension_semantics<parallel>], iteration_bounds = array<i64: 1>, scalar_prefetch = 0 : i64, scratch_operands = 0 : i64, tpu.core_type = #tpu.core_type<tc>, window_params = [{transform_indices = @transform_0, window_bounds = array<i64: 2, 8>}, {transform_indices = @transform_1, window_bounds = array<i64: 8, 232, 128>}, {transform_indices = @transform_2, window_bounds = array<i64: 232, 128>}, {transform_indices = @transform_3, window_bounds = array<i64: 2, 232, 128>}]} {
    %c0 = arith.constant 0 : index
    %c0_0 = arith.constant 0 : index
    %0 = memref.load %arg1[%c0, %c0_0] : memref<2x8xf32, #tpu.memory_space<smem>>
    %c0_1 = arith.constant 0 : index
    %c1 = arith.constant 1 : index
    %1 = memref.load %arg1[%c0_1, %c1] : memref<2x8xf32, #tpu.memory_space<smem>>
    %c0_2 = arith.constant 0 : index
    %c2 = arith.constant 2 : index
    %2 = memref.load %arg1[%c0_2, %c2] : memref<2x8xf32, #tpu.memory_space<smem>>
    %c0_3 = arith.constant 0 : index
    %c3 = arith.constant 3 : index
    %3 = memref.load %arg1[%c0_3, %c3] : memref<2x8xf32, #tpu.memory_space<smem>>
    %c0_4 = arith.constant 0 : index
    %c4 = arith.constant 4 : index
    %4 = memref.load %arg1[%c0_4, %c4] : memref<2x8xf32, #tpu.memory_space<smem>>
    %c0_5 = arith.constant 0 : index
    %c5 = arith.constant 5 : index
    %5 = memref.load %arg1[%c0_5, %c5] : memref<2x8xf32, #tpu.memory_space<smem>>
    %c0_6 = arith.constant 0 : index
    %c6 = arith.constant 6 : index
    %6 = memref.load %arg1[%c0_6, %c6] : memref<2x8xf32, #tpu.memory_space<smem>>
    %c0_7 = arith.constant 0 : index
    %c7 = arith.constant 7 : index
    %7 = memref.load %arg1[%c0_7, %c7] : memref<2x8xf32, #tpu.memory_space<smem>>
    %c0_8 = arith.constant 0 : index
    %c0_9 = arith.constant 0 : index
    %8 = vector.load %arg3[%c0_8, %c0_9] : memref<232x128xf32, #tpu.memory_space<vmem>>, vector<64x128xf32>
    %c0_10 = arith.constant 0 : index
    %c0_11 = arith.constant 0 : index
    %c0_12 = arith.constant 0 : index
    %9 = vector.load %arg2[%c0_10, %c0_11, %c0_12] : memref<8x232x128xf32, #tpu.memory_space<vmem>>, vector<1x64x128xf32>
    %10 = vector.shape_cast %9 : vector<1x64x128xf32> to vector<64x128xf32>
    %11 = vector.broadcast %0 : f32 to vector<64x128xf32>
    %12 = arith.mulf %11, %10 : vector<64x128xf32>
    %13 = arith.addf %8, %12 : vector<64x128xf32>
    %c1_13 = arith.constant 1 : index
    %c0_14 = arith.constant 0 : index
    %c0_15 = arith.constant 0 : index
    %14 = vector.load %arg2[%c1_13, %c0_14, %c0_15] : memref<8x232x128xf32, #tpu.memory_space<vmem>>, vector<1x64x128xf32>
    %15 = vector.shape_cast %14 : vector<1x64x128xf32> to vector<64x128xf32>
    %16 = vector.broadcast %1 : f32 to vector<64x128xf32>
    %17 = arith.mulf %16, %15 : vector<64x128xf32>
    %18 = arith.addf %13, %17 : vector<64x128xf32>
    %c2_16 = arith.constant 2 : index
    %c0_17 = arith.constant 0 : index
    %c0_18 = arith.constant 0 : index
    %19 = vector.load %arg2[%c2_16, %c0_17, %c0_18] : memref<8x232x128xf32, #tpu.memory_space<vmem>>, vector<1x64x128xf32>
    %20 = vector.shape_cast %19 : vector<1x64x128xf32> to vector<64x128xf32>
    %21 = vector.broadcast %2 : f32 to vector<64x128xf32>
    %22 = arith.mulf %21, %20 : vector<64x128xf32>
    %23 = arith.addf %18, %22 : vector<64x128xf32>
    %c3_19 = arith.constant 3 : index
    %c0_20 = arith.constant 0 : index
    %c0_21 = arith.constant 0 : index
    %24 = vector.load %arg2[%c3_19, %c0_20, %c0_21] : memref<8x232x128xf32, #tpu.memory_space<vmem>>, vector<1x64x128xf32>
    %25 = vector.shape_cast %24 : vector<1x64x128xf32> to vector<64x128xf32>
    %26 = vector.broadcast %3 : f32 to vector<64x128xf32>
    %27 = arith.mulf %26, %25 : vector<64x128xf32>
    %28 = arith.addf %23, %27 : vector<64x128xf32>
    %c4_22 = arith.constant 4 : index
    %c0_23 = arith.constant 0 : index
    %c0_24 = arith.constant 0 : index
    %29 = vector.load %arg2[%c4_22, %c0_23, %c0_24] : memref<8x232x128xf32, #tpu.memory_space<vmem>>, vector<1x64x128xf32>
    %30 = vector.shape_cast %29 : vector<1x64x128xf32> to vector<64x128xf32>
    %31 = vector.broadcast %4 : f32 to vector<64x128xf32>
    %32 = arith.mulf %31, %30 : vector<64x128xf32>
    %33 = arith.addf %28, %32 : vector<64x128xf32>
    %c5_25 = arith.constant 5 : index
    %c0_26 = arith.constant 0 : index
    %c0_27 = arith.constant 0 : index
    %34 = vector.load %arg2[%c5_25, %c0_26, %c0_27] : memref<8x232x128xf32, #tpu.memory_space<vmem>>, vector<1x64x128xf32>
    %35 = vector.shape_cast %34 : vector<1x64x128xf32> to vector<64x128xf32>
    %36 = vector.broadcast %5 : f32 to vector<64x128xf32>
    %37 = arith.mulf %36, %35 : vector<64x128xf32>
    %38 = arith.addf %33, %37 : vector<64x128xf32>
    %c6_28 = arith.constant 6 : index
    %c0_29 = arith.constant 0 : index
    %c0_30 = arith.constant 0 : index
    %39 = vector.load %arg2[%c6_28, %c0_29, %c0_30] : memref<8x232x128xf32, #tpu.memory_space<vmem>>, vector<1x64x128xf32>
    %40 = vector.shape_cast %39 : vector<1x64x128xf32> to vector<64x128xf32>
    %41 = vector.broadcast %6 : f32 to vector<64x128xf32>
    %42 = arith.mulf %41, %40 : vector<64x128xf32>
    %43 = arith.addf %38, %42 : vector<64x128xf32>
    %c7_31 = arith.constant 7 : index
    %c0_32 = arith.constant 0 : index
    %c0_33 = arith.constant 0 : index
    %44 = vector.load %arg2[%c7_31, %c0_32, %c0_33] : memref<8x232x128xf32, #tpu.memory_space<vmem>>, vector<1x64x128xf32>
    %45 = vector.shape_cast %44 : vector<1x64x128xf32> to vector<64x128xf32>
    %46 = vector.broadcast %7 : f32 to vector<64x128xf32>
    %47 = arith.mulf %46, %45 : vector<64x128xf32>
    %48 = arith.addf %43, %47 : vector<64x128xf32>
    %cst = arith.constant 0.000000e+00 : f32
    %cst_34 = arith.constant 1.000000e+00 : f32
    %49 = vector.broadcast %cst : f32 to vector<64x128xf32>
    %50 = arith.maximumf %49, %48 : vector<64x128xf32>
    %51 = vector.broadcast %cst_34 : f32 to vector<64x128xf32>
    %52 = arith.minimumf %51, %50 : vector<64x128xf32>
    %c0_35 = arith.constant 0 : index
    %c0_36 = arith.constant 0 : index
    %c0_37 = arith.constant 0 : index
    %53 = vector.load %arg4[%c0_35, %c0_36, %c0_37] : memref<2x232x128xf32, #tpu.memory_space<vmem>>, vector<1x64x128xf32>
    %54 = vector.shape_cast %53 : vector<1x64x128xf32> to vector<64x128xf32>
    %55 = vector.shape_cast %52 : vector<64x128xf32> to vector<1x64x128xf32>
    tpu.vector_store %arg4[%c0_35, %c0_36, %c0_37], %55 {strides = array<i32>} : memref<2x232x128xf32, #tpu.memory_space<vmem>>, vector<1x64x128xf32>,
    %c64 = arith.constant 64 : index
    %c0_38 = arith.constant 0 : index
    %56 = vector.load %arg3[%c64, %c0_38] : memref<232x128xf32, #tpu.memory_space<vmem>>, vector<64x128xf32>
    %c0_39 = arith.constant 0 : index
    %c64_40 = arith.constant 64 : index
    %c0_41 = arith.constant 0 : index
    %57 = vector.load %arg2[%c0_39, %c64_40, %c0_41] : memref<8x232x128xf32, #tpu.memory_space<vmem>>, vector<1x64x128xf32>
    %58 = vector.shape_cast %57 : vector<1x64x128xf32> to vector<64x128xf32>
    %59 = vector.broadcast %0 : f32 to vector<64x128xf32>
    %60 = arith.mulf %59, %58 : vector<64x128xf32>
    %61 = arith.addf %56, %60 : vector<64x128xf32>
    %c1_42 = arith.constant 1 : index
    %c64_43 = arith.constant 64 : index
    %c0_44 = arith.constant 0 : index
    %62 = vector.load %arg2[%c1_42, %c64_43, %c0_44] : memref<8x232x128xf32, #tpu.memory_space<vmem>>, vector<1x64x128xf32>
    %63 = vector.shape_cast %62 : vector<1x64x128xf32> to vector<64x128xf32>
    %64 = vector.broadcast %1 : f32 to vector<64x128xf32>
    %65 = arith.mulf %64, %63 : vector<64x128xf32>
    %66 = arith.addf %61, %65 : vector<64x128xf32>
    %c2_45 = arith.constant 2 : index
    %c64_46 = arith.constant 64 : index
    %c0_47 = arith.constant 0 : index
    %67 = vector.load %arg2[%c2_45, %c64_46, %c0_47] : memref<8x232x128xf32, #tpu.memory_space<vmem>>, vector<1x64x128xf32>
    %68 = vector.shape_cast %67 : vector<1x64x128xf32> to vector<64x128xf32>
    %69 = vector.broadcast %2 : f32 to vector<64x128xf32>
    %70 = arith.mulf %69, %68 : vector<64x128xf32>
    %71 = arith.addf %66, %70 : vector<64x128xf32>
    %c3_48 = arith.constant 3 : index
    %c64_49 = arith.constant 64 : index
    %c0_50 = arith.constant 0 : index
    %72 = vector.load %arg2[%c3_48, %c64_49, %c0_50] : memref<8x232x128xf32, #tpu.memory_space<vmem>>, vector<1x64x128xf32>
    %73 = vector.shape_cast %72 : vector<1x64x128xf32> to vector<64x128xf32>
    %74 = vector.broadcast %3 : f32 to vector<64x128xf32>
    %75 = arith.mulf %74, %73 : vector<64x128xf32>
    %76 = arith.addf %71, %75 : vector<64x128xf32>
    %c4_51 = arith.constant 4 : index
    %c64_52 = arith.constant 64 : index
    %c0_53 = arith.constant 0 : index
    %77 = vector.load %arg2[%c4_51, %c64_52, %c0_53] : memref<8x232x128xf32, #tpu.memory_space<vmem>>, vector<1x64x128xf32>
    %78 = vector.shape_cast %77 : vector<1x64x128xf32> to vector<64x128xf32>
    %79 = vector.broadcast %4 : f32 to vector<64x128xf32>
    %80 = arith.mulf %79, %78 : vector<64x128xf32>
    %81 = arith.addf %76, %80 : vector<64x128xf32>
    %c5_54 = arith.constant 5 : index
    %c64_55 = arith.constant 64 : index
    %c0_56 = arith.constant 0 : index
    %82 = vector.load %arg2[%c5_54, %c64_55, %c0_56] : memref<8x232x128xf32, #tpu.memory_space<vmem>>, vector<1x64x128xf32>
    %83 = vector.shape_cast %82 : vector<1x64x128xf32> to vector<64x128xf32>
    %84 = vector.broadcast %5 : f32 to vector<64x128xf32>
    %85 = arith.mulf %84, %83 : vector<64x128xf32>
    %86 = arith.addf %81, %85 : vector<64x128xf32>
    %c6_57 = arith.constant 6 : index
    %c64_58 = arith.constant 64 : index
    %c0_59 = arith.constant 0 : index
    %87 = vector.load %arg2[%c6_57, %c64_58, %c0_59] : memref<8x232x128xf32, #tpu.memory_space<vmem>>, vector<1x64x128xf32>
    %88 = vector.shape_cast %87 : vector<1x64x128xf32> to vector<64x128xf32>
    %89 = vector.broadcast %6 : f32 to vector<64x128xf32>
    %90 = arith.mulf %89, %88 : vector<64x128xf32>
    %91 = arith.addf %86, %90 : vector<64x128xf32>
    %c7_60 = arith.constant 7 : index
    %c64_61 = arith.constant 64 : index
    %c0_62 = arith.constant 0 : index
    %92 = vector.load %arg2[%c7_60, %c64_61, %c0_62] : memref<8x232x128xf32, #tpu.memory_space<vmem>>, vector<1x64x128xf32>
    %93 = vector.shape_cast %92 : vector<1x64x128xf32> to vector<64x128xf32>
    %94 = vector.broadcast %7 : f32 to vector<64x128xf32>
    %95 = arith.mulf %94, %93 : vector<64x128xf32>
    %96 = arith.addf %91, %95 : vector<64x128xf32>
    %cst_63 = arith.constant 0.000000e+00 : f32
    %cst_64 = arith.constant 1.000000e+00 : f32
    %97 = vector.broadcast %cst_63 : f32 to vector<64x128xf32>
    %98 = arith.maximumf %97, %96 : vector<64x128xf32>
    %99 = vector.broadcast %cst_64 : f32 to vector<64x128xf32>
    %100 = arith.minimumf %99, %98 : vector<64x128xf32>
    %c0_65 = arith.constant 0 : index
    %c64_66 = arith.constant 64 : index
    %c0_67 = arith.constant 0 : index
    %101 = vector.load %arg4[%c0_65, %c64_66, %c0_67] : memref<2x232x128xf32, #tpu.memory_space<vmem>>, vector<1x64x128xf32>
    %102 = vector.shape_cast %101 : vector<1x64x128xf32> to vector<64x128xf32>
    %103 = vector.shape_cast %100 : vector<64x128xf32> to vector<1x64x128xf32>
    tpu.vector_store %arg4[%c0_65, %c64_66, %c0_67], %103 {strides = array<i32>} : memref<2x232x128xf32, #tpu.memory_space<vmem>>, vector<1x64x128xf32>,
    %c128 = arith.constant 128 : index
    %c0_68 = arith.constant 0 : index
    %104 = vector.load %arg3[%c128, %c0_68] : memref<232x128xf32, #tpu.memory_space<vmem>>, vector<64x128xf32>
    %c0_69 = arith.constant 0 : index
    %c128_70 = arith.constant 128 : index
    %c0_71 = arith.constant 0 : index
    %105 = vector.load %arg2[%c0_69, %c128_70, %c0_71] : memref<8x232x128xf32, #tpu.memory_space<vmem>>, vector<1x64x128xf32>
    %106 = vector.shape_cast %105 : vector<1x64x128xf32> to vector<64x128xf32>
    %107 = vector.broadcast %0 : f32 to vector<64x128xf32>
    %108 = arith.mulf %107, %106 : vector<64x128xf32>
    %109 = arith.addf %104, %108 : vector<64x128xf32>
    %c1_72 = arith.constant 1 : index
    %c128_73 = arith.constant 128 : index
    %c0_74 = arith.constant 0 : index
    %110 = vector.load %arg2[%c1_72, %c128_73, %c0_74] : memref<8x232x128xf32, #tpu.memory_space<vmem>>, vector<1x64x128xf32>
    %111 = vector.shape_cast %110 : vector<1x64x128xf32> to vector<64x128xf32>
    %112 = vector.broadcast %1 : f32 to vector<64x128xf32>
    %113 = arith.mulf %112, %111 : vector<64x128xf32>
    %114 = arith.addf %109, %113 : vector<64x128xf32>
    %c2_75 = arith.constant 2 : index
    %c128_76 = arith.constant 128 : index
    %c0_77 = arith.constant 0 : index
    %115 = vector.load %arg2[%c2_75, %c128_76, %c0_77] : memref<8x232x128xf32, #tpu.memory_space<vmem>>, vector<1x64x128xf32>
    %116 = vector.shape_cast %115 : vector<1x64x128xf32> to vector<64x128xf32>
    %117 = vector.broadcast %2 : f32 to vector<64x128xf32>
    %118 = arith.mulf %117, %116 : vector<64x128xf32>
    %119 = arith.addf %114, %118 : vector<64x128xf32>
    %c3_78 = arith.constant 3 : index
    %c128_79 = arith.constant 128 : index
    %c0_80 = arith.constant 0 : index
    %120 = vector.load %arg2[%c3_78, %c128_79, %c0_80] : memref<8x232x128xf32, #tpu.memory_space<vmem>>, vector<1x64x128xf32>
    %121 = vector.shape_cast %120 : vector<1x64x128xf32> to vector<64x128xf32>
    %122 = vector.broadcast %3 : f32 to vector<64x128xf32>
    %123 = arith.mulf %122, %121 : vector<64x128xf32>
    %124 = arith.addf %119, %123 : vector<64x128xf32>
    %c4_81 = arith.constant 4 : index
    %c128_82 = arith.constant 128 : index
    %c0_83 = arith.constant 0 : index
    %125 = vector.load %arg2[%c4_81, %c128_82, %c0_83] : memref<8x232x128xf32, #tpu.memory_space<vmem>>, vector<1x64x128xf32>
    %126 = vector.shape_cast %125 : vector<1x64x128xf32> to vector<64x128xf32>
    %127 = vector.broadcast %4 : f32 to vector<64x128xf32>
    %128 = arith.mulf %127, %126 : vector<64x128xf32>
    %129 = arith.addf %124, %128 : vector<64x128xf32>
    %c5_84 = arith.constant 5 : index
    %c128_85 = arith.constant 128 : index
    %c0_86 = arith.constant 0 : index
    %130 = vector.load %arg2[%c5_84, %c128_85, %c0_86] : memref<8x232x128xf32, #tpu.memory_space<vmem>>, vector<1x64x128xf32>
    %131 = vector.shape_cast %130 : vector<1x64x128xf32> to vector<64x128xf32>
    %132 = vector.broadcast %5 : f32 to vector<64x128xf32>
    %133 = arith.mulf %132, %131 : vector<64x128xf32>
    %134 = arith.addf %129, %133 : vector<64x128xf32>
    %c6_87 = arith.constant 6 : index
    %c128_88 = arith.constant 128 : index
    %c0_89 = arith.constant 0 : index
    %135 = vector.load %arg2[%c6_87, %c128_88, %c0_89] : memref<8x232x128xf32, #tpu.memory_space<vmem>>, vector<1x64x128xf32>
    %136 = vector.shape_cast %135 : vector<1x64x128xf32> to vector<64x128xf32>
    %137 = vector.broadcast %6 : f32 to vector<64x128xf32>
    %138 = arith.mulf %137, %136 : vector<64x128xf32>
    %139 = arith.addf %134, %138 : vector<64x128xf32>
    %c7_90 = arith.constant 7 : index
    %c128_91 = arith.constant 128 : index
    %c0_92 = arith.constant 0 : index
    %140 = vector.load %arg2[%c7_90, %c128_91, %c0_92] : memref<8x232x128xf32, #tpu.memory_space<vmem>>, vector<1x64x128xf32>
    %141 = vector.shape_cast %140 : vector<1x64x128xf32> to vector<64x128xf32>
    %142 = vector.broadcast %7 : f32 to vector<64x128xf32>
    %143 = arith.mulf %142, %141 : vector<64x128xf32>
    %144 = arith.addf %139, %143 : vector<64x128xf32>
    %cst_93 = arith.constant 0.000000e+00 : f32
    %cst_94 = arith.constant 1.000000e+00 : f32
    %145 = vector.broadcast %cst_93 : f32 to vector<64x128xf32>
    %146 = arith.maximumf %145, %144 : vector<64x128xf32>
    %147 = vector.broadcast %cst_94 : f32 to vector<64x128xf32>
    %148 = arith.minimumf %147, %146 : vector<64x128xf32>
    %c0_95 = arith.constant 0 : index
    %c128_96 = arith.constant 128 : index
    %c0_97 = arith.constant 0 : index
    %149 = vector.load %arg4[%c0_95, %c128_96, %c0_97] : memref<2x232x128xf32, #tpu.memory_space<vmem>>, vector<1x64x128xf32>
    %150 = vector.shape_cast %149 : vector<1x64x128xf32> to vector<64x128xf32>
    %151 = vector.shape_cast %148 : vector<64x128xf32> to vector<1x64x128xf32>
    tpu.vector_store %arg4[%c0_95, %c128_96, %c0_97], %151 {strides = array<i32>} : memref<2x232x128xf32, #tpu.memory_space<vmem>>, vector<1x64x128xf32>,
    %c192 = arith.constant 192 : index
    %c0_98 = arith.constant 0 : index
    %152 = vector.load %arg3[%c192, %c0_98] : memref<232x128xf32, #tpu.memory_space<vmem>>, vector<40x128xf32>
    %c0_99 = arith.constant 0 : index
    %c192_100 = arith.constant 192 : index
    %c0_101 = arith.constant 0 : index
    %153 = vector.load %arg2[%c0_99, %c192_100, %c0_101] : memref<8x232x128xf32, #tpu.memory_space<vmem>>, vector<1x40x128xf32>
    %154 = vector.shape_cast %153 : vector<1x40x128xf32> to vector<40x128xf32>
    %155 = vector.broadcast %0 : f32 to vector<40x128xf32>
    %156 = arith.mulf %155, %154 : vector<40x128xf32>
    %157 = arith.addf %152, %156 : vector<40x128xf32>
    %c1_102 = arith.constant 1 : index
    %c192_103 = arith.constant 192 : index
    %c0_104 = arith.constant 0 : index
    %158 = vector.load %arg2[%c1_102, %c192_103, %c0_104] : memref<8x232x128xf32, #tpu.memory_space<vmem>>, vector<1x40x128xf32>
    %159 = vector.shape_cast %158 : vector<1x40x128xf32> to vector<40x128xf32>
    %160 = vector.broadcast %1 : f32 to vector<40x128xf32>
    %161 = arith.mulf %160, %159 : vector<40x128xf32>
    %162 = arith.addf %157, %161 : vector<40x128xf32>
    %c2_105 = arith.constant 2 : index
    %c192_106 = arith.constant 192 : index
    %c0_107 = arith.constant 0 : index
    %163 = vector.load %arg2[%c2_105, %c192_106, %c0_107] : memref<8x232x128xf32, #tpu.memory_space<vmem>>, vector<1x40x128xf32>
    %164 = vector.shape_cast %163 : vector<1x40x128xf32> to vector<40x128xf32>
    %165 = vector.broadcast %2 : f32 to vector<40x128xf32>
    %166 = arith.mulf %165, %164 : vector<40x128xf32>
    %167 = arith.addf %162, %166 : vector<40x128xf32>
    %c3_108 = arith.constant 3 : index
    %c192_109 = arith.constant 192 : index
    %c0_110 = arith.constant 0 : index
    %168 = vector.load %arg2[%c3_108, %c192_109, %c0_110] : memref<8x232x128xf32, #tpu.memory_space<vmem>>, vector<1x40x128xf32>
    %169 = vector.shape_cast %168 : vector<1x40x128xf32> to vector<40x128xf32>
    %170 = vector.broadcast %3 : f32 to vector<40x128xf32>
    %171 = arith.mulf %170, %169 : vector<40x128xf32>
    %172 = arith.addf %167, %171 : vector<40x128xf32>
    %c4_111 = arith.constant 4 : index
    %c192_112 = arith.constant 192 : index
    %c0_113 = arith.constant 0 : index
    %173 = vector.load %arg2[%c4_111, %c192_112, %c0_113] : memref<8x232x128xf32, #tpu.memory_space<vmem>>, vector<1x40x128xf32>
    %174 = vector.shape_cast %173 : vector<1x40x128xf32> to vector<40x128xf32>
    %175 = vector.broadcast %4 : f32 to vector<40x128xf32>
    %176 = arith.mulf %175, %174 : vector<40x128xf32>
    %177 = arith.addf %172, %176 : vector<40x128xf32>
    %c5_114 = arith.constant 5 : index
    %c192_115 = arith.constant 192 : index
    %c0_116 = arith.constant 0 : index
    %178 = vector.load %arg2[%c5_114, %c192_115, %c0_116] : memref<8x232x128xf32, #tpu.memory_space<vmem>>, vector<1x40x128xf32>
    %179 = vector.shape_cast %178 : vector<1x40x128xf32> to vector<40x128xf32>
    %180 = vector.broadcast %5 : f32 to vector<40x128xf32>
    %181 = arith.mulf %180, %179 : vector<40x128xf32>
    %182 = arith.addf %177, %181 : vector<40x128xf32>
    %c6_117 = arith.constant 6 : index
    %c192_118 = arith.constant 192 : index
    %c0_119 = arith.constant 0 : index
    %183 = vector.load %arg2[%c6_117, %c192_118, %c0_119] : memref<8x232x128xf32, #tpu.memory_space<vmem>>, vector<1x40x128xf32>
    %184 = vector.shape_cast %183 : vector<1x40x128xf32> to vector<40x128xf32>
    %185 = vector.broadcast %6 : f32 to vector<40x128xf32>
    %186 = arith.mulf %185, %184 : vector<40x128xf32>
    %187 = arith.addf %182, %186 : vector<40x128xf32>
    %c7_120 = arith.constant 7 : index
    %c192_121 = arith.constant 192 : index
    %c0_122 = arith.constant 0 : index
    %188 = vector.load %arg2[%c7_120, %c192_121, %c0_122] : memref<8x232x128xf32, #tpu.memory_space<vmem>>, vector<1x40x128xf32>
    %189 = vector.shape_cast %188 : vector<1x40x128xf32> to vector<40x128xf32>
    %190 = vector.broadcast %7 : f32 to vector<40x128xf32>
    %191 = arith.mulf %190, %189 : vector<40x128xf32>
    %192 = arith.addf %187, %191 : vector<40x128xf32>
    %cst_123 = arith.constant 0.000000e+00 : f32
    %cst_124 = arith.constant 1.000000e+00 : f32
    %193 = vector.broadcast %cst_123 : f32 to vector<40x128xf32>
    %194 = arith.maximumf %193, %192 : vector<40x128xf32>
    %195 = vector.broadcast %cst_124 : f32 to vector<40x128xf32>
    %196 = arith.minimumf %195, %194 : vector<40x128xf32>
    %c0_125 = arith.constant 0 : index
    %c192_126 = arith.constant 192 : index
    %c0_127 = arith.constant 0 : index
    %197 = vector.load %arg4[%c0_125, %c192_126, %c0_127] : memref<2x232x128xf32, #tpu.memory_space<vmem>>, vector<1x40x128xf32>
    %198 = vector.shape_cast %197 : vector<1x40x128xf32> to vector<40x128xf32>
    %199 = vector.shape_cast %196 : vector<40x128xf32> to vector<1x40x128xf32>
    tpu.vector_store %arg4[%c0_125, %c192_126, %c0_127], %199 {strides = array<i32>} : memref<2x232x128xf32, #tpu.memory_space<vmem>>, vector<1x40x128xf32>,
    %c1_128 = arith.constant 1 : index
    %c0_129 = arith.constant 0 : index
    %200 = memref.load %arg1[%c1_128, %c0_129] : memref<2x8xf32, #tpu.memory_space<smem>>
    %c1_130 = arith.constant 1 : index
    %c1_131 = arith.constant 1 : index
    %201 = memref.load %arg1[%c1_130, %c1_131] : memref<2x8xf32, #tpu.memory_space<smem>>
    %c1_132 = arith.constant 1 : index
    %c2_133 = arith.constant 2 : index
    %202 = memref.load %arg1[%c1_132, %c2_133] : memref<2x8xf32, #tpu.memory_space<smem>>
    %c1_134 = arith.constant 1 : index
    %c3_135 = arith.constant 3 : index
    %203 = memref.load %arg1[%c1_134, %c3_135] : memref<2x8xf32, #tpu.memory_space<smem>>
    %c1_136 = arith.constant 1 : index
    %c4_137 = arith.constant 4 : index
    %204 = memref.load %arg1[%c1_136, %c4_137] : memref<2x8xf32, #tpu.memory_space<smem>>
    %c1_138 = arith.constant 1 : index
    %c5_139 = arith.constant 5 : index
    %205 = memref.load %arg1[%c1_138, %c5_139] : memref<2x8xf32, #tpu.memory_space<smem>>
    %c1_140 = arith.constant 1 : index
    %c6_141 = arith.constant 6 : index
    %206 = memref.load %arg1[%c1_140, %c6_141] : memref<2x8xf32, #tpu.memory_space<smem>>
    %c1_142 = arith.constant 1 : index
    %c7_143 = arith.constant 7 : index
    %207 = memref.load %arg1[%c1_142, %c7_143] : memref<2x8xf32, #tpu.memory_space<smem>>
    %c0_144 = arith.constant 0 : index
    %c0_145 = arith.constant 0 : index
    %208 = vector.load %arg3[%c0_144, %c0_145] : memref<232x128xf32, #tpu.memory_space<vmem>>, vector<64x128xf32>
    %c0_146 = arith.constant 0 : index
    %c0_147 = arith.constant 0 : index
    %c0_148 = arith.constant 0 : index
    %209 = vector.load %arg2[%c0_146, %c0_147, %c0_148] : memref<8x232x128xf32, #tpu.memory_space<vmem>>, vector<1x64x128xf32>
    %210 = vector.shape_cast %209 : vector<1x64x128xf32> to vector<64x128xf32>
    %211 = vector.broadcast %200 : f32 to vector<64x128xf32>
    %212 = arith.mulf %211, %210 : vector<64x128xf32>
    %213 = arith.addf %208, %212 : vector<64x128xf32>
    %c1_149 = arith.constant 1 : index
    %c0_150 = arith.constant 0 : index
    %c0_151 = arith.constant 0 : index
    %214 = vector.load %arg2[%c1_149, %c0_150, %c0_151] : memref<8x232x128xf32, #tpu.memory_space<vmem>>, vector<1x64x128xf32>
    %215 = vector.shape_cast %214 : vector<1x64x128xf32> to vector<64x128xf32>
    %216 = vector.broadcast %201 : f32 to vector<64x128xf32>
    %217 = arith.mulf %216, %215 : vector<64x128xf32>
    %218 = arith.addf %213, %217 : vector<64x128xf32>
    %c2_152 = arith.constant 2 : index
    %c0_153 = arith.constant 0 : index
    %c0_154 = arith.constant 0 : index
    %219 = vector.load %arg2[%c2_152, %c0_153, %c0_154] : memref<8x232x128xf32, #tpu.memory_space<vmem>>, vector<1x64x128xf32>
    %220 = vector.shape_cast %219 : vector<1x64x128xf32> to vector<64x128xf32>
    %221 = vector.broadcast %202 : f32 to vector<64x128xf32>
    %222 = arith.mulf %221, %220 : vector<64x128xf32>
    %223 = arith.addf %218, %222 : vector<64x128xf32>
    %c3_155 = arith.constant 3 : index
    %c0_156 = arith.constant 0 : index
    %c0_157 = arith.constant 0 : index
    %224 = vector.load %arg2[%c3_155, %c0_156, %c0_157] : memref<8x232x128xf32, #tpu.memory_space<vmem>>, vector<1x64x128xf32>
    %225 = vector.shape_cast %224 : vector<1x64x128xf32> to vector<64x128xf32>
    %226 = vector.broadcast %203 : f32 to vector<64x128xf32>
    %227 = arith.mulf %226, %225 : vector<64x128xf32>
    %228 = arith.addf %223, %227 : vector<64x128xf32>
    %c4_158 = arith.constant 4 : index
    %c0_159 = arith.constant 0 : index
    %c0_160 = arith.constant 0 : index
    %229 = vector.load %arg2[%c4_158, %c0_159, %c0_160] : memref<8x232x128xf32, #tpu.memory_space<vmem>>, vector<1x64x128xf32>
    %230 = vector.shape_cast %229 : vector<1x64x128xf32> to vector<64x128xf32>
    %231 = vector.broadcast %204 : f32 to vector<64x128xf32>
    %232 = arith.mulf %231, %230 : vector<64x128xf32>
    %233 = arith.addf %228, %232 : vector<64x128xf32>
    %c5_161 = arith.constant 5 : index
    %c0_162 = arith.constant 0 : index
    %c0_163 = arith.constant 0 : index
    %234 = vector.load %arg2[%c5_161, %c0_162, %c0_163] : memref<8x232x128xf32, #tpu.memory_space<vmem>>, vector<1x64x128xf32>
    %235 = vector.shape_cast %234 : vector<1x64x128xf32> to vector<64x128xf32>
    %236 = vector.broadcast %205 : f32 to vector<64x128xf32>
    %237 = arith.mulf %236, %235 : vector<64x128xf32>
    %238 = arith.addf %233, %237 : vector<64x128xf32>
    %c6_164 = arith.constant 6 : index
    %c0_165 = arith.constant 0 : index
    %c0_166 = arith.constant 0 : index
    %239 = vector.load %arg2[%c6_164, %c0_165, %c0_166] : memref<8x232x128xf32, #tpu.memory_space<vmem>>, vector<1x64x128xf32>
    %240 = vector.shape_cast %239 : vector<1x64x128xf32> to vector<64x128xf32>
    %241 = vector.broadcast %206 : f32 to vector<64x128xf32>
    %242 = arith.mulf %241, %240 : vector<64x128xf32>
    %243 = arith.addf %238, %242 : vector<64x128xf32>
    %c7_167 = arith.constant 7 : index
    %c0_168 = arith.constant 0 : index
    %c0_169 = arith.constant 0 : index
    %244 = vector.load %arg2[%c7_167, %c0_168, %c0_169] : memref<8x232x128xf32, #tpu.memory_space<vmem>>, vector<1x64x128xf32>
    %245 = vector.shape_cast %244 : vector<1x64x128xf32> to vector<64x128xf32>
    %246 = vector.broadcast %207 : f32 to vector<64x128xf32>
    %247 = arith.mulf %246, %245 : vector<64x128xf32>
    %248 = arith.addf %243, %247 : vector<64x128xf32>
    %cst_170 = arith.constant 0.000000e+00 : f32
    %cst_171 = arith.constant 1.000000e+00 : f32
    %249 = vector.broadcast %cst_170 : f32 to vector<64x128xf32>
    %250 = arith.maximumf %249, %248 : vector<64x128xf32>
    %251 = vector.broadcast %cst_171 : f32 to vector<64x128xf32>
    %252 = arith.minimumf %251, %250 : vector<64x128xf32>
    %c1_172 = arith.constant 1 : index
    %c0_173 = arith.constant 0 : index
    %c0_174 = arith.constant 0 : index
    %253 = vector.load %arg4[%c1_172, %c0_173, %c0_174] : memref<2x232x128xf32, #tpu.memory_space<vmem>>, vector<1x64x128xf32>
    %254 = vector.shape_cast %253 : vector<1x64x128xf32> to vector<64x128xf32>
    %255 = vector.shape_cast %252 : vector<64x128xf32> to vector<1x64x128xf32>
    tpu.vector_store %arg4[%c1_172, %c0_173, %c0_174], %255 {strides = array<i32>} : memref<2x232x128xf32, #tpu.memory_space<vmem>>, vector<1x64x128xf32>,
    %c64_175 = arith.constant 64 : index
    %c0_176 = arith.constant 0 : index
    %256 = vector.load %arg3[%c64_175, %c0_176] : memref<232x128xf32, #tpu.memory_space<vmem>>, vector<64x128xf32>
    %c0_177 = arith.constant 0 : index
    %c64_178 = arith.constant 64 : index
    %c0_179 = arith.constant 0 : index
    %257 = vector.load %arg2[%c0_177, %c64_178, %c0_179] : memref<8x232x128xf32, #tpu.memory_space<vmem>>, vector<1x64x128xf32>
    %258 = vector.shape_cast %257 : vector<1x64x128xf32> to vector<64x128xf32>
    %259 = vector.broadcast %200 : f32 to vector<64x128xf32>
    %260 = arith.mulf %259, %258 : vector<64x128xf32>
    %261 = arith.addf %256, %260 : vector<64x128xf32>
    %c1_180 = arith.constant 1 : index
    %c64_181 = arith.constant 64 : index
    %c0_182 = arith.constant 0 : index
    %262 = vector.load %arg2[%c1_180, %c64_181, %c0_182] : memref<8x232x128xf32, #tpu.memory_space<vmem>>, vector<1x64x128xf32>
    %263 = vector.shape_cast %262 : vector<1x64x128xf32> to vector<64x128xf32>
    %264 = vector.broadcast %201 : f32 to vector<64x128xf32>
    %265 = arith.mulf %264, %263 : vector<64x128xf32>
    %266 = arith.addf %261, %265 : vector<64x128xf32>
    %c2_183 = arith.constant 2 : index
    %c64_184 = arith.constant 64 : index
    %c0_185 = arith.constant 0 : index
    %267 = vector.load %arg2[%c2_183, %c64_184, %c0_185] : memref<8x232x128xf32, #tpu.memory_space<vmem>>, vector<1x64x128xf32>
    %268 = vector.shape_cast %267 : vector<1x64x128xf32> to vector<64x128xf32>
    %269 = vector.broadcast %202 : f32 to vector<64x128xf32>
    %270 = arith.mulf %269, %268 : vector<64x128xf32>
    %271 = arith.addf %266, %270 : vector<64x128xf32>
    %c3_186 = arith.constant 3 : index
    %c64_187 = arith.constant 64 : index
    %c0_188 = arith.constant 0 : index
    %272 = vector.load %arg2[%c3_186, %c64_187, %c0_188] : memref<8x232x128xf32, #tpu.memory_space<vmem>>, vector<1x64x128xf32>
    %273 = vector.shape_cast %272 : vector<1x64x128xf32> to vector<64x128xf32>
    %274 = vector.broadcast %203 : f32 to vector<64x128xf32>
    %275 = arith.mulf %274, %273 : vector<64x128xf32>
    %276 = arith.addf %271, %275 : vector<64x128xf32>
    %c4_189 = arith.constant 4 : index
    %c64_190 = arith.constant 64 : index
    %c0_191 = arith.constant 0 : index
    %277 = vector.load %arg2[%c4_189, %c64_190, %c0_191] : memref<8x232x128xf32, #tpu.memory_space<vmem>>, vector<1x64x128xf32>
    %278 = vector.shape_cast %277 : vector<1x64x128xf32> to vector<64x128xf32>
    %279 = vector.broadcast %204 : f32 to vector<64x128xf32>
    %280 = arith.mulf %279, %278 : vector<64x128xf32>
    %281 = arith.addf %276, %280 : vector<64x128xf32>
    %c5_192 = arith.constant 5 : index
    %c64_193 = arith.constant 64 : index
    %c0_194 = arith.constant 0 : index
    %282 = vector.load %arg2[%c5_192, %c64_193, %c0_194] : memref<8x232x128xf32, #tpu.memory_space<vmem>>, vector<1x64x128xf32>
    %283 = vector.shape_cast %282 : vector<1x64x128xf32> to vector<64x128xf32>
    %284 = vector.broadcast %205 : f32 to vector<64x128xf32>
    %285 = arith.mulf %284, %283 : vector<64x128xf32>
    %286 = arith.addf %281, %285 : vector<64x128xf32>
    %c6_195 = arith.constant 6 : index
    %c64_196 = arith.constant 64 : index
    %c0_197 = arith.constant 0 : index
    %287 = vector.load %arg2[%c6_195, %c64_196, %c0_197] : memref<8x232x128xf32, #tpu.memory_space<vmem>>, vector<1x64x128xf32>
    %288 = vector.shape_cast %287 : vector<1x64x128xf32> to vector<64x128xf32>
    %289 = vector.broadcast %206 : f32 to vector<64x128xf32>
    %290 = arith.mulf %289, %288 : vector<64x128xf32>
    %291 = arith.addf %286, %290 : vector<64x128xf32>
    %c7_198 = arith.constant 7 : index
    %c64_199 = arith.constant 64 : index
    %c0_200 = arith.constant 0 : index
    %292 = vector.load %arg2[%c7_198, %c64_199, %c0_200] : memref<8x232x128xf32, #tpu.memory_space<vmem>>, vector<1x64x128xf32>
    %293 = vector.shape_cast %292 : vector<1x64x128xf32> to vector<64x128xf32>
    %294 = vector.broadcast %207 : f32 to vector<64x128xf32>
    %295 = arith.mulf %294, %293 : vector<64x128xf32>
    %296 = arith.addf %291, %295 : vector<64x128xf32>
    %cst_201 = arith.constant 0.000000e+00 : f32
    %cst_202 = arith.constant 1.000000e+00 : f32
    %297 = vector.broadcast %cst_201 : f32 to vector<64x128xf32>
    %298 = arith.maximumf %297, %296 : vector<64x128xf32>
    %299 = vector.broadcast %cst_202 : f32 to vector<64x128xf32>
    %300 = arith.minimumf %299, %298 : vector<64x128xf32>
    %c1_203 = arith.constant 1 : index
    %c64_204 = arith.constant 64 : index
    %c0_205 = arith.constant 0 : index
    %301 = vector.load %arg4[%c1_203, %c64_204, %c0_205] : memref<2x232x128xf32, #tpu.memory_space<vmem>>, vector<1x64x128xf32>
    %302 = vector.shape_cast %301 : vector<1x64x128xf32> to vector<64x128xf32>
    %303 = vector.shape_cast %300 : vector<64x128xf32> to vector<1x64x128xf32>
    tpu.vector_store %arg4[%c1_203, %c64_204, %c0_205], %303 {strides = array<i32>} : memref<2x232x128xf32, #tpu.memory_space<vmem>>, vector<1x64x128xf32>,
    %c128_206 = arith.constant 128 : index
    %c0_207 = arith.constant 0 : index
    %304 = vector.load %arg3[%c128_206, %c0_207] : memref<232x128xf32, #tpu.memory_space<vmem>>, vector<64x128xf32>
    %c0_208 = arith.constant 0 : index
    %c128_209 = arith.constant 128 : index
    %c0_210 = arith.constant 0 : index
    %305 = vector.load %arg2[%c0_208, %c128_209, %c0_210] : memref<8x232x128xf32, #tpu.memory_space<vmem>>, vector<1x64x128xf32>
    %306 = vector.shape_cast %305 : vector<1x64x128xf32> to vector<64x128xf32>
    %307 = vector.broadcast %200 : f32 to vector<64x128xf32>
    %308 = arith.mulf %307, %306 : vector<64x128xf32>
    %309 = arith.addf %304, %308 : vector<64x128xf32>
    %c1_211 = arith.constant 1 : index
    %c128_212 = arith.constant 128 : index
    %c0_213 = arith.constant 0 : index
    %310 = vector.load %arg2[%c1_211, %c128_212, %c0_213] : memref<8x232x128xf32, #tpu.memory_space<vmem>>, vector<1x64x128xf32>
    %311 = vector.shape_cast %310 : vector<1x64x128xf32> to vector<64x128xf32>
    %312 = vector.broadcast %201 : f32 to vector<64x128xf32>
    %313 = arith.mulf %312, %311 : vector<64x128xf32>
    %314 = arith.addf %309, %313 : vector<64x128xf32>
    %c2_214 = arith.constant 2 : index
    %c128_215 = arith.constant 128 : index
    %c0_216 = arith.constant 0 : index
    %315 = vector.load %arg2[%c2_214, %c128_215, %c0_216] : memref<8x232x128xf32, #tpu.memory_space<vmem>>, vector<1x64x128xf32>
    %316 = vector.shape_cast %315 : vector<1x64x128xf32> to vector<64x128xf32>
    %317 = vector.broadcast %202 : f32 to vector<64x128xf32>
    %318 = arith.mulf %317, %316 : vector<64x128xf32>
    %319 = arith.addf %314, %318 : vector<64x128xf32>
    %c3_217 = arith.constant 3 : index
    %c128_218 = arith.constant 128 : index
    %c0_219 = arith.constant 0 : index
    %320 = vector.load %arg2[%c3_217, %c128_218, %c0_219] : memref<8x232x128xf32, #tpu.memory_space<vmem>>, vector<1x64x128xf32>
    %321 = vector.shape_cast %320 : vector<1x64x128xf32> to vector<64x128xf32>
    %322 = vector.broadcast %203 : f32 to vector<64x128xf32>
    %323 = arith.mulf %322, %321 : vector<64x128xf32>
    %324 = arith.addf %319, %323 : vector<64x128xf32>
    %c4_220 = arith.constant 4 : index
    %c128_221 = arith.constant 128 : index
    %c0_222 = arith.constant 0 : index
    %325 = vector.load %arg2[%c4_220, %c128_221, %c0_222] : memref<8x232x128xf32, #tpu.memory_space<vmem>>, vector<1x64x128xf32>
    %326 = vector.shape_cast %325 : vector<1x64x128xf32> to vector<64x128xf32>
    %327 = vector.broadcast %204 : f32 to vector<64x128xf32>
    %328 = arith.mulf %327, %326 : vector<64x128xf32>
    %329 = arith.addf %324, %328 : vector<64x128xf32>
    %c5_223 = arith.constant 5 : index
    %c128_224 = arith.constant 128 : index
    %c0_225 = arith.constant 0 : index
    %330 = vector.load %arg2[%c5_223, %c128_224, %c0_225] : memref<8x232x128xf32, #tpu.memory_space<vmem>>, vector<1x64x128xf32>
    %331 = vector.shape_cast %330 : vector<1x64x128xf32> to vector<64x128xf32>
    %332 = vector.broadcast %205 : f32 to vector<64x128xf32>
    %333 = arith.mulf %332, %331 : vector<64x128xf32>
    %334 = arith.addf %329, %333 : vector<64x128xf32>
    %c6_226 = arith.constant 6 : index
    %c128_227 = arith.constant 128 : index
    %c0_228 = arith.constant 0 : index
    %335 = vector.load %arg2[%c6_226, %c128_227, %c0_228] : memref<8x232x128xf32, #tpu.memory_space<vmem>>, vector<1x64x128xf32>
    %336 = vector.shape_cast %335 : vector<1x64x128xf32> to vector<64x128xf32>
    %337 = vector.broadcast %206 : f32 to vector<64x128xf32>
    %338 = arith.mulf %337, %336 : vector<64x128xf32>
    %339 = arith.addf %334, %338 : vector<64x128xf32>
    %c7_229 = arith.constant 7 : index
    %c128_230 = arith.constant 128 : index
    %c0_231 = arith.constant 0 : index
    %340 = vector.load %arg2[%c7_229, %c128_230, %c0_231] : memref<8x232x128xf32, #tpu.memory_space<vmem>>, vector<1x64x128xf32>
    %341 = vector.shape_cast %340 : vector<1x64x128xf32> to vector<64x128xf32>
    %342 = vector.broadcast %207 : f32 to vector<64x128xf32>
    %343 = arith.mulf %342, %341 : vector<64x128xf32>
    %344 = arith.addf %339, %343 : vector<64x128xf32>
    %cst_232 = arith.constant 0.000000e+00 : f32
    %cst_233 = arith.constant 1.000000e+00 : f32
    %345 = vector.broadcast %cst_232 : f32 to vector<64x128xf32>
    %346 = arith.maximumf %345, %344 : vector<64x128xf32>
    %347 = vector.broadcast %cst_233 : f32 to vector<64x128xf32>
    %348 = arith.minimumf %347, %346 : vector<64x128xf32>
    %c1_234 = arith.constant 1 : index
    %c128_235 = arith.constant 128 : index
    %c0_236 = arith.constant 0 : index
    %349 = vector.load %arg4[%c1_234, %c128_235, %c0_236] : memref<2x232x128xf32, #tpu.memory_space<vmem>>, vector<1x64x128xf32>
    %350 = vector.shape_cast %349 : vector<1x64x128xf32> to vector<64x128xf32>
    %351 = vector.shape_cast %348 : vector<64x128xf32> to vector<1x64x128xf32>
    tpu.vector_store %arg4[%c1_234, %c128_235, %c0_236], %351 {strides = array<i32>} : memref<2x232x128xf32, #tpu.memory_space<vmem>>, vector<1x64x128xf32>,
    %c192_237 = arith.constant 192 : index
    %c0_238 = arith.constant 0 : index
    %352 = vector.load %arg3[%c192_237, %c0_238] : memref<232x128xf32, #tpu.memory_space<vmem>>, vector<40x128xf32>
    %c0_239 = arith.constant 0 : index
    %c192_240 = arith.constant 192 : index
    %c0_241 = arith.constant 0 : index
    %353 = vector.load %arg2[%c0_239, %c192_240, %c0_241] : memref<8x232x128xf32, #tpu.memory_space<vmem>>, vector<1x40x128xf32>
    %354 = vector.shape_cast %353 : vector<1x40x128xf32> to vector<40x128xf32>
    %355 = vector.broadcast %200 : f32 to vector<40x128xf32>
    %356 = arith.mulf %355, %354 : vector<40x128xf32>
    %357 = arith.addf %352, %356 : vector<40x128xf32>
    %c1_242 = arith.constant 1 : index
    %c192_243 = arith.constant 192 : index
    %c0_244 = arith.constant 0 : index
    %358 = vector.load %arg2[%c1_242, %c192_243, %c0_244] : memref<8x232x128xf32, #tpu.memory_space<vmem>>, vector<1x40x128xf32>
    %359 = vector.shape_cast %358 : vector<1x40x128xf32> to vector<40x128xf32>
    %360 = vector.broadcast %201 : f32 to vector<40x128xf32>
    %361 = arith.mulf %360, %359 : vector<40x128xf32>
    %362 = arith.addf %357, %361 : vector<40x128xf32>
    %c2_245 = arith.constant 2 : index
    %c192_246 = arith.constant 192 : index
    %c0_247 = arith.constant 0 : index
    %363 = vector.load %arg2[%c2_245, %c192_246, %c0_247] : memref<8x232x128xf32, #tpu.memory_space<vmem>>, vector<1x40x128xf32>
    %364 = vector.shape_cast %363 : vector<1x40x128xf32> to vector<40x128xf32>
    %365 = vector.broadcast %202 : f32 to vector<40x128xf32>
    %366 = arith.mulf %365, %364 : vector<40x128xf32>
    %367 = arith.addf %362, %366 : vector<40x128xf32>
    %c3_248 = arith.constant 3 : index
    %c192_249 = arith.constant 192 : index
    %c0_250 = arith.constant 0 : index
    %368 = vector.load %arg2[%c3_248, %c192_249, %c0_250] : memref<8x232x128xf32, #tpu.memory_space<vmem>>, vector<1x40x128xf32>
    %369 = vector.shape_cast %368 : vector<1x40x128xf32> to vector<40x128xf32>
    %370 = vector.broadcast %203 : f32 to vector<40x128xf32>
    %371 = arith.mulf %370, %369 : vector<40x128xf32>
    %372 = arith.addf %367, %371 : vector<40x128xf32>
    %c4_251 = arith.constant 4 : index
    %c192_252 = arith.constant 192 : index
    %c0_253 = arith.constant 0 : index
    %373 = vector.load %arg2[%c4_251, %c192_252, %c0_253] : memref<8x232x128xf32, #tpu.memory_space<vmem>>, vector<1x40x128xf32>
    %374 = vector.shape_cast %373 : vector<1x40x128xf32> to vector<40x128xf32>
    %375 = vector.broadcast %204 : f32 to vector<40x128xf32>
    %376 = arith.mulf %375, %374 : vector<40x128xf32>
    %377 = arith.addf %372, %376 : vector<40x128xf32>
    %c5_254 = arith.constant 5 : index
    %c192_255 = arith.constant 192 : index
    %c0_256 = arith.constant 0 : index
    %378 = vector.load %arg2[%c5_254, %c192_255, %c0_256] : memref<8x232x128xf32, #tpu.memory_space<vmem>>, vector<1x40x128xf32>
    %379 = vector.shape_cast %378 : vector<1x40x128xf32> to vector<40x128xf32>
    %380 = vector.broadcast %205 : f32 to vector<40x128xf32>
    %381 = arith.mulf %380, %379 : vector<40x128xf32>
    %382 = arith.addf %377, %381 : vector<40x128xf32>
    %c6_257 = arith.constant 6 : index
    %c192_258 = arith.constant 192 : index
    %c0_259 = arith.constant 0 : index
    %383 = vector.load %arg2[%c6_257, %c192_258, %c0_259] : memref<8x232x128xf32, #tpu.memory_space<vmem>>, vector<1x40x128xf32>
    %384 = vector.shape_cast %383 : vector<1x40x128xf32> to vector<40x128xf32>
    %385 = vector.broadcast %206 : f32 to vector<40x128xf32>
    %386 = arith.mulf %385, %384 : vector<40x128xf32>
    %387 = arith.addf %382, %386 : vector<40x128xf32>
    %c7_260 = arith.constant 7 : index
    %c192_261 = arith.constant 192 : index
    %c0_262 = arith.constant 0 : index
    %388 = vector.load %arg2[%c7_260, %c192_261, %c0_262] : memref<8x232x128xf32, #tpu.memory_space<vmem>>, vector<1x40x128xf32>
    %389 = vector.shape_cast %388 : vector<1x40x128xf32> to vector<40x128xf32>
    %390 = vector.broadcast %207 : f32 to vector<40x128xf32>
    %391 = arith.mulf %390, %389 : vector<40x128xf32>
    %392 = arith.addf %387, %391 : vector<40x128xf32>
    %cst_263 = arith.constant 0.000000e+00 : f32
    %cst_264 = arith.constant 1.000000e+00 : f32
    %393 = vector.broadcast %cst_263 : f32 to vector<40x128xf32>
    %394 = arith.maximumf %393, %392 : vector<40x128xf32>
    %395 = vector.broadcast %cst_264 : f32 to vector<40x128xf32>
    %396 = arith.minimumf %395, %394 : vector<40x128xf32>
    %c1_265 = arith.constant 1 : index
    %c192_266 = arith.constant 192 : index
    %c0_267 = arith.constant 0 : index
    %397 = vector.load %arg4[%c1_265, %c192_266, %c0_267] : memref<2x232x128xf32, #tpu.memory_space<vmem>>, vector<1x40x128xf32>
    %398 = vector.shape_cast %397 : vector<1x40x128xf32> to vector<40x128xf32>
    %399 = vector.shape_cast %396 : vector<40x128xf32> to vector<1x40x128xf32>
    tpu.vector_store %arg4[%c1_265, %c192_266, %c0_267], %399 {strides = array<i32>} : memref<2x232x128xf32, #tpu.memory_space<vmem>>, vector<1x40x128xf32>,
    return
  }
  func.func @transform_0(%arg0: i32) -> (i32, i32) {
    %c0_i32 = arith.constant 0 : i32
    %c0_i32_0 = arith.constant 0 : i32
    %c0_i32_1 = arith.constant 0 : i32
    return %c0_i32, %c0_i32_0 : i32, i32
  }
  func.func @transform_1(%arg0: i32) -> (i32, i32, i32) {
    %c0_i32 = arith.constant 0 : i32
    %c0_i32_0 = arith.constant 0 : i32
    %c0_i32_1 = arith.constant 0 : i32
    return %c0_i32, %arg0, %c0_i32_0 : i32, i32, i32
  }
  func.func @transform_2(%arg0: i32) -> (i32, i32) {
    %c0_i32 = arith.constant 0 : i32
    %c0_i32_0 = arith.constant 0 : i32
    return %arg0, %c0_i32 : i32, i32
  }
  func.func @transform_3(%arg0: i32) -> (i32, i32, i32) {
    %c0_i32 = arith.constant 0 : i32
    %c0_i32_0 = arith.constant 0 : i32
    %c0_i32_1 = arith.constant 0 : i32
    return %c0_i32, %arg0, %c0_i32_0 : i32, i32, i32
  }
}

</mosaic_0001>

<llo_original>
// kernel: tpu_custom_call.1
$region0: #{tpu_custom_call.1}
  #allocation0 [shape = 'u32[]', space=smem, size = 0x4, offset = 0x4, fixed_abs, tag = 'smem constant byte address 0x4 - core index']
  #allocation1 [shape = 'u32[144,128]{1,0:T(1,128)}', space=vmem, size = 0x12000, scoped, tag = 'internal scratch']
  %s0 = inlined_call_operand.hbm [shape: f32[2,8], index: 0, kind: input, shape index: {}]
  %s1 = inlined_call_operand.hbm [shape: f32[8,232,128], index: 1, kind: input, shape index: {}]
  %s2 = inlined_call_operand.hbm [shape: f32[232,128], index: 2, kind: input, shape index: {}]
  %s3 = inlined_call_operand.hbm [shape: f32[2,232,128], index: 3, kind: output, shape index: {}]
  %s4 = sld [smem:[#allocation0]]
  $region34: #{tpu_custom_call.1} parent=0
    _
  %s6 = ssub.s32 1, %s4
  %s7 = scalar_select 0, %s6, %s4
  $region1: #{tpu_custom_call.1} parent=0
    #allocation2 [shape = 'u8[1024]{0}', space=smem, size = 0x400, scoped, tag = 'input window, operand 0, single buffered']
    #allocation3 [shape = 's32[1]{0}', space=sflag, size = 0x4, scoped, tag = 'scoped memory for tpu_custom_call.1']
    #allocation4 [shape = 's32[1]{0}', space=sflag, size = 0x4, scoped, tag = 'scoped memory for tpu_custom_call.1']
    #allocation5 [shape = 's32[1]{0}', space=sflag, size = 0x4, scoped, tag = 'scoped memory for tpu_custom_call.1']
    #allocation6 [shape = 'u8[950272]{0}', space=vmem, size = 0xe8000, scoped, tag = 'input window, operand 1, single buffered']
    #allocation7 [shape = 'u8[118784]{0}', space=vmem, size = 0x1d000, scoped, tag = 'input window, operand 2, single buffered']
    #allocation8 [shape = 's32[1]{0}', space=sflag, size = 0x4, scoped, tag = 'scoped memory for tpu_custom_call.1']
    #allocation9 [shape = 'u8[237568]{0}', space=vmem, size = 0x3a000, scoped, tag = 'output window, operand 0, single buffered']
    %8 = vsyncpa [#allocation5], 0
    %9 = vsyncpa [#allocation3], 0
    %10 = vsyncpa [#allocation8], 0
    %11 = vsyncpa [#allocation4], 0
    // Predicated region
    $region2: #{tpu_custom_call.1} parent=1 // pred_check
      _
    $region3: #{tpu_custom_call.1} parent=1 // pred_check_branch
      %13 = sbr.rel (0) target = $region5
    $region4: #{tpu_custom_call.1} parent=1 // pred_region
      %s15 = ssub.s32 32, 32
      %16 = vsyncadd [#allocation5], %s15
      %19 = dma.hbm_to_smem %s0, 32, [#allocation2], [#allocation5]
    $region5: #{tpu_custom_call.1} parent=1 // pred_fallthru
      _
    // Predicated region
    $region6: #{tpu_custom_call.1} parent=1 // pred_check
      _
    $region7: #{tpu_custom_call.1} parent=1 // pred_check_branch
      %21 = sbr.rel (0) target = $region9
    $region8: #{tpu_custom_call.1} parent=1 // pred_region
      %s23 = ssub.s32 29696, 29696
      %24 = vsyncadd [#allocation3], %s23
      %s25 = sshll.u32 [#allocation6], 4
      %s26 = int_to_ptr.vmem [resolvable:$true] %s25
      %31 = dma.hbm_to_vmem [thread:$0]  %s1, 29696, %s26, [#allocation3], 128, 128, 8
    $region9: #{tpu_custom_call.1} parent=1 // pred_fallthru
      _
    // Predicated region
    $region10: #{tpu_custom_call.1} parent=1 // pred_check
      _
    $region11: #{tpu_custom_call.1} parent=1 // pred_check_branch
      %33 = sbr.rel (0) target = $region13
    $region12: #{tpu_custom_call.1} parent=1 // pred_region
      %s35 = ssub.s32 3712, 3712
      %36 = vsyncadd [#allocation8], %s35
      %s37 = sshll.u32 [#allocation7], 4
      %s38 = int_to_ptr.vmem [resolvable:$true] %s37
      %43 = dma.hbm_to_vmem [thread:$0]  %s2, 3712, %s38, [#allocation8], 128, 128, 8
    $region13: #{tpu_custom_call.1} parent=1 // pred_fallthru
      _
    // Predicated region
    $region14: #{tpu_custom_call.1} parent=1 // pred_check
      _
    $region15: #{tpu_custom_call.1} parent=1 // pred_check_branch
      %45 = sbr.rel (0) target = $region17
    $region16: #{tpu_custom_call.1} parent=1 // pred_region
      %46 = dma.done [#allocation5], 32
    $region17: #{tpu_custom_call.1} parent=1 // pred_fallthru
      _
    // Predicated region
    $region18: #{tpu_custom_call.1} parent=1 // pred_check
      _
    $region19: #{tpu_custom_call.1} parent=1 // pred_check_branch
      %48 = sbr.rel (0) target = $region21
    $region20: #{tpu_custom_call.1} parent=1 // pred_region
      %49 = dma.done [#allocation3], 29696
    $region21: #{tpu_custom_call.1} parent=1 // pred_fallthru
      _
    // Predicated region
    $region22: #{tpu_custom_call.1} parent=1 // pred_check
      _
    $region23: #{tpu_custom_call.1} parent=1 // pred_check_branch
      %51 = sbr.rel (0) target = $region25
    $region24: #{tpu_custom_call.1} parent=1 // pred_region
      %52 = dma.done [#allocation8], 3712
    $region25: #{tpu_custom_call.1} parent=1 // pred_fallthru
      _
    %53 = sfence
    %s54 = sld [smem:[#allocation2]]
    %s55 = sld [smem:[#allocation2 + $0x1]]
    %s56 = sld [smem:[#allocation2 + $0x2]]
    %s57 = sld [smem:[#allocation2 + $0x3]]
    %s58 = sld [smem:[#allocation2 + $0x4]]
    %s59 = sld [smem:[#allocation2 + $0x5]]
    %s60 = sld [smem:[#allocation2 + $0x6]]
    %s61 = sld [smem:[#allocation2 + $0x7]]
    %v62 = vld [vmem:[#allocation7] sm:$0xff]
    %v63 = vld [vmem:[#allocation7 + $0x8] sm:$0xff]
    %v64 = vld [vmem:[#allocation7 + $0x10] sm:$0xff]
    %v65 = vld [vmem:[#allocation7 + $0x18] sm:$0xff]
    %v66 = vld [vmem:[#allocation7 + $0x20] sm:$0xff]
    %v67 = vld [vmem:[#allocation7 + $0x28] sm:$0xff]
    %v68 = vld [vmem:[#allocation7 + $0x30] sm:$0xff]
    %v69 = vld [vmem:[#allocation7 + $0x38] sm:$0xff]
    %v70 = vld [vmem:[#allocation6] sm:$0xff]
    %v71 = vld [vmem:[#allocation6 + $0x8] sm:$0xff]
    %v72 = vld [vmem:[#allocation6 + $0x10] sm:$0xff]
    %v73 = vld [vmem:[#allocation6 + $0x18] sm:$0xff]
    %v74 = vld [vmem:[#allocation6 + $0x20] sm:$0xff]
    %v75 = vld [vmem:[#allocation6 + $0x28] sm:$0xff]
    %v76 = vld [vmem:[#allocation6 + $0x30] sm:$0xff]
    %v77 = vld [vmem:[#allocation6 + $0x38] sm:$0xff]
    %v78 = vstv %s54
    %v79 = vmul.f32 %v78, %v70
    %v80 = vmul.f32 %v78, %v71
    %v81 = vmul.f32 %v78, %v72
    %v82 = vmul.f32 %v78, %v73
    %v83 = vmul.f32 %v78, %v74
    %v84 = vmul.f32 %v78, %v75
    %v85 = vmul.f32 %v78, %v76
    %v86 = vmul.f32 %v78, %v77
    %v87 = vadd.f32 %v62, %v79
    %v88 = vadd.f32 %v63, %v80
    %v89 = vadd.f32 %v64, %v81
    %v90 = vadd.f32 %v65, %v82
    %v91 = vadd.f32 %v66, %v83
    %v92 = vadd.f32 %v67, %v84
    %v93 = vadd.f32 %v68, %v85
    %v94 = vadd.f32 %v69, %v86
    %s95 = scalar_lea.vmem [#allocation6], 232
    %v96 = vld [vmem:[%s95] sm:$0xff]
    %v97 = vld [vmem:[%s95 + $0x8] sm:$0xff]
    %v98 = vld [vmem:[%s95 + $0x10] sm:$0xff]
    %v99 = vld [vmem:[%s95 + $0x18] sm:$0xff]
    %v100 = vld [vmem:[%s95 + $0x20] sm:$0xff]
    %v101 = vld [vmem:[%s95 + $0x28] sm:$0xff]
    %v102 = vld [vmem:[%s95 + $0x30] sm:$0xff]
    %v103 = vld [vmem:[%s95 + $0x38] sm:$0xff]
    %v104 = vstv %s55
    %v105 = vmul.f32 %v104, %v96
    %v106 = vmul.f32 %v104, %v97
    %v107 = vmul.f32 %v104, %v98
    %v108 = vmul.f32 %v104, %v99
    %v109 = vmul.f32 %v104, %v100
    %v110 = vmul.f32 %v104, %v101
    %v111 = vmul.f32 %v104, %v102
    %v112 = vmul.f32 %v104, %v103
    %v113 = vadd.f32 %v87, %v105
    %v114 = vadd.f32 %v88, %v106
    %v115 = vadd.f32 %v89, %v107
    %v116 = vadd.f32 %v90, %v108
    %v117 = vadd.f32 %v91, %v109
    %v118 = vadd.f32 %v92, %v110
    %v119 = vadd.f32 %v93, %v111
    %v120 = vadd.f32 %v94, %v112
    %s121 = scalar_lea.vmem [#allocation6], 464
    %v122 = vld [vmem:[%s121] sm:$0xff]
    %v123 = vld [vmem:[%s121 + $0x8] sm:$0xff]
    %v124 = vld [vmem:[%s121 + $0x10] sm:$0xff]
    %v125 = vld [vmem:[%s121 + $0x18] sm:$0xff]
    %v126 = vld [vmem:[%s121 + $0x20] sm:$0xff]
    %v127 = vld [vmem:[%s121 + $0x28] sm:$0xff]
    %v128 = vld [vmem:[%s121 + $0x30] sm:$0xff]
    %v129 = vld [vmem:[%s121 + $0x38] sm:$0xff]
    %v130 = vstv %s56
    %v131 = vmul.f32 %v130, %v122
    %v132 = vmul.f32 %v130, %v123
    %v133 = vmul.f32 %v130, %v124
    %v134 = vmul.f32 %v130, %v125
    %v135 = vmul.f32 %v130, %v126
    %v136 = vmul.f32 %v130, %v127
    %v137 = vmul.f32 %v130, %v128
    %v138 = vmul.f32 %v130, %v129
    %v139 = vadd.f32 %v113, %v131
    %v140 = vadd.f32 %v114, %v132
    %v141 = vadd.f32 %v115, %v133
    %v142 = vadd.f32 %v116, %v134
    %v143 = vadd.f32 %v117, %v135
    %v144 = vadd.f32 %v118, %v136
    %v145 = vadd.f32 %v119, %v137
    %v146 = vadd.f32 %v120, %v138
    %s147 = scalar_lea.vmem [#allocation6], 696
    %v148 = vld [vmem:[%s147] sm:$0xff]
    %v149 = vld [vmem:[%s147 + $0x8] sm:$0xff]
    %v150 = vld [vmem:[%s147 + $0x10] sm:$0xff]
    %v151 = vld [vmem:[%s147 + $0x18] sm:$0xff]
    %v152 = vld [vmem:[%s147 + $0x20] sm:$0xff]
    %v153 = vld [vmem:[%s147 + $0x28] sm:$0xff]
    %v154 = vld [vmem:[%s147 + $0x30] sm:$0xff]
    %v155 = vld [vmem:[%s147 + $0x38] sm:$0xff]
    %v156 = vstv %s57
    %v157 = vmul.f32 %v156, %v148
    %v158 = vmul.f32 %v156, %v149
    %v159 = vmul.f32 %v156, %v150
    %v160 = vmul.f32 %v156, %v151
    %v161 = vmul.f32 %v156, %v152
    %v162 = vmul.f32 %v156, %v153
    %v163 = vmul.f32 %v156, %v154
    %v164 = vmul.f32 %v156, %v155
    %v165 = vadd.f32 %v139, %v157
    %v166 = vadd.f32 %v140, %v158
    %v167 = vadd.f32 %v141, %v159
    %v168 = vadd.f32 %v142, %v160
    %v169 = vadd.f32 %v143, %v161
    %v170 = vadd.f32 %v144, %v162
    %v171 = vadd.f32 %v145, %v163
    %v172 = vadd.f32 %v146, %v164
    %s173 = scalar_lea.vmem [#allocation6], 928
    %v174 = vld [vmem:[%s173] sm:$0xff]
    %v175 = vld [vmem:[%s173 + $0x8] sm:$0xff]
    %v176 = vld [vmem:[%s173 + $0x10] sm:$0xff]
    %v177 = vld [vmem:[%s173 + $0x18] sm:$0xff]
    %v178 = vld [vmem:[%s173 + $0x20] sm:$0xff]
    %v179 = vld [vmem:[%s173 + $0x28] sm:$0xff]
    %v180 = vld [vmem:[%s173 + $0x30] sm:$0xff]
    %v181 = vld [vmem:[%s173 + $0x38] sm:$0xff]
    %v182 = vstv %s58
    %v183 = vmul.f32 %v182, %v174
    %v184 = vmul.f32 %v182, %v175
    %v185 = vmul.f32 %v182, %v176
    %v186 = vmul.f32 %v182, %v177
    %v187 = vmul.f32 %v182, %v178
    %v188 = vmul.f32 %v182, %v179
    %v189 = vmul.f32 %v182, %v180
    %v190 = vmul.f32 %v182, %v181
    %v191 = vadd.f32 %v165, %v183
    %v192 = vadd.f32 %v166, %v184
    %v193 = vadd.f32 %v167, %v185
    %v194 = vadd.f32 %v168, %v186
    %v195 = vadd.f32 %v169, %v187
    %v196 = vadd.f32 %v170, %v188
    %v197 = vadd.f32 %v171, %v189
    %v198 = vadd.f32 %v172, %v190
    %s199 = scalar_lea.vmem [#allocation6], 1160
    %v200 = vld [vmem:[%s199] sm:$0xff]
    %v201 = vld [vmem:[%s199 + $0x8] sm:$0xff]
    %v202 = vld [vmem:[%s199 + $0x10] sm:$0xff]
    %v203 = vld [vmem:[%s199 + $0x18] sm:$0xff]
    %v204 = vld [vmem:[%s199 + $0x20] sm:$0xff]
    %v205 = vld [vmem:[%s199 + $0x28] sm:$0xff]
    %v206 = vld [vmem:[%s199 + $0x30] sm:$0xff]
    %v207 = vld [vmem:[%s199 + $0x38] sm:$0xff]
    %v208 = vstv %s59
    %v209 = vmul.f32 %v208, %v200
    %v210 = vmul.f32 %v208, %v201
    %v211 = vmul.f32 %v208, %v202
    %v212 = vmul.f32 %v208, %v203
    %v213 = vmul.f32 %v208, %v204
    %v214 = vmul.f32 %v208, %v205
    %v215 = vmul.f32 %v208, %v206
    %v216 = vmul.f32 %v208, %v207
    %v217 = vadd.f32 %v191, %v209
    %v218 = vadd.f32 %v192, %v210
    %v219 = vadd.f32 %v193, %v211
    %v220 = vadd.f32 %v194, %v212
    %v221 = vadd.f32 %v195, %v213
    %v222 = vadd.f32 %v196, %v214
    %v223 = vadd.f32 %v197, %v215
    %v224 = vadd.f32 %v198, %v216
    %s225 = scalar_lea.vmem [#allocation6], 1392
    %v226 = vld [vmem:[%s225] sm:$0xff]
    %v227 = vld [vmem:[%s225 + $0x8] sm:$0xff]
    %v228 = vld [vmem:[%s225 + $0x10] sm:$0xff]
    %v229 = vld [vmem:[%s225 + $0x18] sm:$0xff]
    %v230 = vld [vmem:[%s225 + $0x20] sm:$0xff]
    %v231 = vld [vmem:[%s225 + $0x28] sm:$0xff]
    %v232 = vld [vmem:[%s225 + $0x30] sm:$0xff]
    %v233 = vld [vmem:[%s225 + $0x38] sm:$0xff]
    %v234 = vstv %s60
    %v235 = vmul.f32 %v234, %v226
    %v236 = vmul.f32 %v234, %v227
    %v237 = vmul.f32 %v234, %v228
    %v238 = vmul.f32 %v234, %v229
    %v239 = vmul.f32 %v234, %v230
    %v240 = vmul.f32 %v234, %v231
    %v241 = vmul.f32 %v234, %v232
    %v242 = vmul.f32 %v234, %v233
    %v243 = vadd.f32 %v217, %v235
    %v244 = vadd.f32 %v218, %v236
    %v245 = vadd.f32 %v219, %v237
    %v246 = vadd.f32 %v220, %v238
    %v247 = vadd.f32 %v221, %v239
    %v248 = vadd.f32 %v222, %v240
    %v249 = vadd.f32 %v223, %v241
    %v250 = vadd.f32 %v224, %v242
    %s251 = scalar_lea.vmem [#allocation6], 1624
    %v252 = vld [vmem:[%s251] sm:$0xff]
    %v253 = vld [vmem:[%s251 + $0x8] sm:$0xff]
    %v254 = vld [vmem:[%s251 + $0x10] sm:$0xff]
    %v255 = vld [vmem:[%s251 + $0x18] sm:$0xff]
    %v256 = vld [vmem:[%s251 + $0x20] sm:$0xff]
    %v257 = vld [vmem:[%s251 + $0x28] sm:$0xff]
    %v258 = vld [vmem:[%s251 + $0x30] sm:$0xff]
    %v259 = vld [vmem:[%s251 + $0x38] sm:$0xff]
    %v260 = vstv %s61
    %v261 = vmul.f32 %v260, %v252
    %v262 = vmul.f32 %v260, %v253
    %v263 = vmul.f32 %v260, %v254
    %v264 = vmul.f32 %v260, %v255
    %v265 = vmul.f32 %v260, %v256
    %v266 = vmul.f32 %v260, %v257
    %v267 = vmul.f32 %v260, %v258
    %v268 = vmul.f32 %v260, %v259
    %v269 = vadd.f32 %v243, %v261
    %v270 = vadd.f32 %v244, %v262
    %v271 = vadd.f32 %v245, %v263
    %v272 = vadd.f32 %v246, %v264
    %v273 = vadd.f32 %v247, %v265
    %v274 = vadd.f32 %v248, %v266
    %v275 = vadd.f32 %v249, %v267
    %v276 = vadd.f32 %v250, %v268
    %v277 = vmax.f32 %v269, 0.0
    %v278 = vmax.f32 %v270, 0.0
    %v279 = vmax.f32 %v271, 0.0
    %v280 = vmax.f32 %v272, 0.0
    %v281 = vmax.f32 %v273, 0.0
    %v282 = vmax.f32 %v274, 0.0
    %v283 = vmax.f32 %v275, 0.0
    %v284 = vmax.f32 %v276, 0.0
    %v285 = vmin.f32 %v277, 1.0
    %v286 = vmin.f32 %v278, 1.0
    %v287 = vmin.f32 %v279, 1.0
    %v288 = vmin.f32 %v280, 1.0
    %v289 = vmin.f32 %v281, 1.0
    %v290 = vmin.f32 %v282, 1.0
    %v291 = vmin.f32 %v283, 1.0
    %v292 = vmin.f32 %v284, 1.0
    %293 = vst [vmem:[#allocation9] sm:$0xff] %v285
    %294 = vst [vmem:[#allocation9 + $0x8] sm:$0xff] %v286
    %295 = vst [vmem:[#allocation9 + $0x10] sm:$0xff] %v287
    %296 = vst [vmem:[#allocation9 + $0x18] sm:$0xff] %v288
    %297 = vst [vmem:[#allocation9 + $0x20] sm:$0xff] %v289
    %298 = vst [vmem:[#allocation9 + $0x28] sm:$0xff] %v290
    %299 = vst [vmem:[#allocation9 + $0x30] sm:$0xff] %v291
    %300 = vst [vmem:[#allocation9 + $0x38] sm:$0xff] %v292
    %v301 = vld [vmem:[#allocation7 + $0x40] sm:$0xff]
    %v302 = vld [vmem:[#allocation7 + $0x48] sm:$0xff]
    %v303 = vld [vmem:[#allocation7 + $0x50] sm:$0xff]
    %v304 = vld [vmem:[#allocation7 + $0x58] sm:$0xff]
    %v305 = vld [vmem:[#allocation7 + $0x60] sm:$0xff]
    %v306 = vld [vmem:[#allocation7 + $0x68] sm:$0xff]
    %v307 = vld [vmem:[#allocation7 + $0x70] sm:$0xff]
    %v308 = vld [vmem:[#allocation7 + $0x78] sm:$0xff]
    %v309 = vld [vmem:[#allocation6 + $0x40] sm:$0xff]
    %v310 = vld [vmem:[#allocation6 + $0x48] sm:$0xff]
    %v311 = vld [vmem:[#allocation6 + $0x50] sm:$0xff]
    %v312 = vld [vmem:[#allocation6 + $0x58] sm:$0xff]
    %v313 = vld [vmem:[#allocation6 + $0x60] sm:$0xff]
    %v314 = vld [vmem:[#allocation6 + $0x68] sm:$0xff]
    %v315 = vld [vmem:[#allocation6 + $0x70] sm:$0xff]
    %v316 = vld [vmem:[#allocation6 + $0x78] sm:$0xff]
    %v317 = vmul.f32 %v78, %v309
    %v318 = vmul.f32 %v78, %v310
    %v319 = vmul.f32 %v78, %v311
    %v320 = vmul.f32 %v78, %v312
    %v321 = vmul.f32 %v78, %v313
    %v322 = vmul.f32 %v78, %v314
    %v323 = vmul.f32 %v78, %v315
    %v324 = vmul.f32 %v78, %v316
    %v325 = vadd.f32 %v301, %v317
    %v326 = vadd.f32 %v302, %v318
    %v327 = vadd.f32 %v303, %v319
    %v328 = vadd.f32 %v304, %v320
    %v329 = vadd.f32 %v305, %v321
    %v330 = vadd.f32 %v306, %v322
    %v331 = vadd.f32 %v307, %v323
    %v332 = vadd.f32 %v308, %v324
    %v333 = vld [vmem:[%s95 + $0x40] sm:$0xff]
    %v334 = vld [vmem:[%s95 + $0x48] sm:$0xff]
    %v335 = vld [vmem:[%s95 + $0x50] sm:$0xff]
    %v336 = vld [vmem:[%s95 + $0x58] sm:$0xff]
    %v337 = vld [vmem:[%s95 + $0x60] sm:$0xff]
    %v338 = vld [vmem:[%s95 + $0x68] sm:$0xff]
    %v339 = vld [vmem:[%s95 + $0x70] sm:$0xff]
    %v340 = vld [vmem:[%s95 + $0x78] sm:$0xff]
    %v341 = vmul.f32 %v104, %v333
    %v342 = vmul.f32 %v104, %v334
    %v343 = vmul.f32 %v104, %v335
    %v344 = vmul.f32 %v104, %v336
    %v345 = vmul.f32 %v104, %v337
    %v346 = vmul.f32 %v104, %v338
    %v347 = vmul.f32 %v104, %v339
    %v348 = vmul.f32 %v104, %v340
    %v349 = vadd.f32 %v325, %v341
    %v350 = vadd.f32 %v326, %v342
    %v351 = vadd.f32 %v327, %v343
    %v352 = vadd.f32 %v328, %v344
    %v353 = vadd.f32 %v329, %v345
    %v354 = vadd.f32 %v330, %v346
    %v355 = vadd.f32 %v331, %v347
    %v356 = vadd.f32 %v332, %v348
    %v357 = vld [vmem:[%s121 + $0x40] sm:$0xff]
    %v358 = vld [vmem:[%s121 + $0x48] sm:$0xff]
    %v359 = vld [vmem:[%s121 + $0x50] sm:$0xff]
    %v360 = vld [vmem:[%s121 + $0x58] sm:$0xff]
    %v361 = vld [vmem:[%s121 + $0x60] sm:$0xff]
    %v362 = vld [vmem:[%s121 + $0x68] sm:$0xff]
    %v363 = vld [vmem:[%s121 + $0x70] sm:$0xff]
    %v364 = vld [vmem:[%s121 + $0x78] sm:$0xff]
    %v365 = vmul.f32 %v130, %v357
    %v366 = vmul.f32 %v130, %v358
    %v367 = vmul.f32 %v130, %v359
    %v368 = vmul.f32 %v130, %v360
    %v369 = vmul.f32 %v130, %v361
    %v370 = vmul.f32 %v130, %v362
    %v371 = vmul.f32 %v130, %v363
    %v372 = vmul.f32 %v130, %v364
    %v373 = vadd.f32 %v349, %v365
    %v374 = vadd.f32 %v350, %v366
    %v375 = vadd.f32 %v351, %v367
    %v376 = vadd.f32 %v352, %v368
    %v377 = vadd.f32 %v353, %v369
    %v378 = vadd.f32 %v354, %v370
    %v379 = vadd.f32 %v355, %v371
    %v380 = vadd.f32 %v356, %v372
    %v381 = vld [vmem:[%s147 + $0x40] sm:$0xff]
    %v382 = vld [vmem:[%s147 + $0x48] sm:$0xff]
    %v383 = vld [vmem:[%s147 + $0x50] sm:$0xff]
    %v384 = vld [vmem:[%s147 + $0x58] sm:$0xff]
    %v385 = vld [vmem:[%s147 + $0x60] sm:$0xff]
    %v386 = vld [vmem:[%s147 + $0x68] sm:$0xff]
    %v387 = vld [vmem:[%s147 + $0x70] sm:$0xff]
    %v388 = vld [vmem:[%s147 + $0x78] sm:$0xff]
    %v389 = vmul.f32 %v156, %v381
    %v390 = vmul.f32 %v156, %v382
    %v391 = vmul.f32 %v156, %v383
    %v392 = vmul.f32 %v156, %v384
    %v393 = vmul.f32 %v156, %v385
    %v394 = vmul.f32 %v156, %v386
    %v395 = vmul.f32 %v156, %v387
    %v396 = vmul.f32 %v156, %v388
    %v397 = vadd.f32 %v373, %v389
    %v398 = vadd.f32 %v374, %v390
    %v399 = vadd.f32 %v375, %v391
    %v400 = vadd.f32 %v376, %v392
    %v401 = vadd.f32 %v377, %v393
    %v402 = vadd.f32 %v378, %v394
    %v403 = vadd.f32 %v379, %v395
    %v404 = vadd.f32 %v380, %v396
    %v405 = vld [vmem:[%s173 + $0x40] sm:$0xff]
    %v406 = vld [vmem:[%s173 + $0x48] sm:$0xff]
    %v407 = vld [vmem:[%s173 + $0x50] sm:$0xff]
    %v408 = vld [vmem:[%s173 + $0x58] sm:$0xff]
    %v409 = vld [vmem:[%s173 + $0x60] sm:$0xff]
    %v410 = vld [vmem:[%s173 + $0x68] sm:$0xff]
    %v411 = vld [vmem:[%s173 + $0x70] sm:$0xff]
    %v412 = vld [vmem:[%s173 + $0x78] sm:$0xff]
    %v413 = vmul.f32 %v182, %v405
    %v414 = vmul.f32 %v182, %v406
    %v415 = vmul.f32 %v182, %v407
    %v416 = vmul.f32 %v182, %v408
    %v417 = vmul.f32 %v182, %v409
    %v418 = vmul.f32 %v182, %v410
    %v419 = vmul.f32 %v182, %v411
    %v420 = vmul.f32 %v182, %v412
    %v421 = vadd.f32 %v397, %v413
    %v422 = vadd.f32 %v398, %v414
    %v423 = vadd.f32 %v399, %v415
    %v424 = vadd.f32 %v400, %v416
    %v425 = vadd.f32 %v401, %v417
    %v426 = vadd.f32 %v402, %v418
    %v427 = vadd.f32 %v403, %v419
    %v428 = vadd.f32 %v404, %v420
    %v429 = vld [vmem:[%s199 + $0x40] sm:$0xff]
    %v430 = vld [vmem:[%s199 + $0x48] sm:$0xff]
    %v431 = vld [vmem:[%s199 + $0x50] sm:$0xff]
    %v432 = vld [vmem:[%s199 + $0x58] sm:$0xff]
    %v433 = vld [vmem:[%s199 + $0x60] sm:$0xff]
    %v434 = vld [vmem:[%s199 + $0x68] sm:$0xff]
    %v435 = vld [vmem:[%s199 + $0x70] sm:$0xff]
    %v436 = vld [vmem:[%s199 + $0x78] sm:$0xff]
    %v437 = vmul.f32 %v208, %v429
    %v438 = vmul.f32 %v208, %v430
    %v439 = vmul.f32 %v208, %v431
    %v440 = vmul.f32 %v208, %v432
    %v441 = vmul.f32 %v208, %v433
    %v442 = vmul.f32 %v208, %v434
    %v443 = vmul.f32 %v208, %v435
    %v444 = vmul.f32 %v208, %v436
    %v445 = vadd.f32 %v421, %v437
    %v446 = vadd.f32 %v422, %v438
    %v447 = vadd.f32 %v423, %v439
    %v448 = vadd.f32 %v424, %v440
    %v449 = vadd.f32 %v425, %v441
    %v450 = vadd.f32 %v426, %v442
    %v451 = vadd.f32 %v427, %v443
    %v452 = vadd.f32 %v428, %v444
    %v453 = vld [vmem:[%s225 + $0x40] sm:$0xff]
    %v454 = vld [vmem:[%s225 + $0x48] sm:$0xff]
    %v455 = vld [vmem:[%s225 + $0x50] sm:$0xff]
    %v456 = vld [vmem:[%s225 + $0x58] sm:$0xff]
    %v457 = vld [vmem:[%s225 + $0x60] sm:$0xff]
    %v458 = vld [vmem:[%s225 + $0x68] sm:$0xff]
    %v459 = vld [vmem:[%s225 + $0x70] sm:$0xff]
    %v460 = vld [vmem:[%s225 + $0x78] sm:$0xff]
    %v461 = vmul.f32 %v234, %v453
    %v462 = vmul.f32 %v234, %v454
    %v463 = vmul.f32 %v234, %v455
    %v464 = vmul.f32 %v234, %v456
    %v465 = vmul.f32 %v234, %v457
    %v466 = vmul.f32 %v234, %v458
    %v467 = vmul.f32 %v234, %v459
    %v468 = vmul.f32 %v234, %v460
    %v469 = vadd.f32 %v445, %v461
    %v470 = vadd.f32 %v446, %v462
    %v471 = vadd.f32 %v447, %v463
    %v472 = vadd.f32 %v448, %v464
    %v473 = vadd.f32 %v449, %v465
    %v474 = vadd.f32 %v450, %v466
    %v475 = vadd.f32 %v451, %v467
    %v476 = vadd.f32 %v452, %v468
    %v477 = vld [vmem:[%s251 + $0x40] sm:$0xff]
    %v478 = vld [vmem:[%s251 + $0x48] sm:$0xff]
    %v479 = vld [vmem:[%s251 + $0x50] sm:$0xff]
    %v480 = vld [vmem:[%s251 + $0x58] sm:$0xff]
    %v481 = vld [vmem:[%s251 + $0x60] sm:$0xff]
    %v482 = vld [vmem:[%s251 + $0x68] sm:$0xff]
    %v483 = vld [vmem:[%s251 + $0x70] sm:$0xff]
    %v484 = vld [vmem:[%s251 + $0x78] sm:$0xff]
    %v485 = vmul.f32 %v260, %v477
    %v486 = vmul.f32 %v260, %v478
    %v487 = vmul.f32 %v260, %v479
    %v488 = vmul.f32 %v260, %v480
    %v489 = vmul.f32 %v260, %v481
    %v490 = vmul.f32 %v260, %v482
    %v491 = vmul.f32 %v260, %v483
    %v492 = vmul.f32 %v260, %v484
    %v493 = vadd.f32 %v469, %v485
    %v494 = vadd.f32 %v470, %v486
    %v495 = vadd.f32 %v471, %v487
    %v496 = vadd.f32 %v472, %v488
    %v497 = vadd.f32 %v473, %v489
    %v498 = vadd.f32 %v474, %v490
    %v499 = vadd.f32 %v475, %v491
    %v500 = vadd.f32 %v476, %v492
    %v501 = vmax.f32 %v493, 0.0
    %v502 = vmax.f32 %v494, 0.0
    %v503 = vmax.f32 %v495, 0.0
    %v504 = vmax.f32 %v496, 0.0
    %v505 = vmax.f32 %v497, 0.0
    %v506 = vmax.f32 %v498, 0.0
    %v507 = vmax.f32 %v499, 0.0
    %v508 = vmax.f32 %v500, 0.0
    %v509 = vmin.f32 %v501, 1.0
    %v510 = vmin.f32 %v502, 1.0
    %v511 = vmin.f32 %v503, 1.0
    %v512 = vmin.f32 %v504, 1.0
    %v513 = vmin.f32 %v505, 1.0
    %v514 = vmin.f32 %v506, 1.0
    %v515 = vmin.f32 %v507, 1.0
    %v516 = vmin.f32 %v508, 1.0
    %517 = vst [vmem:[#allocation9 + $0x40] sm:$0xff] %v509
    %518 = vst [vmem:[#allocation9 + $0x48] sm:$0xff] %v510
    %519 = vst [vmem:[#allocation9 + $0x50] sm:$0xff] %v511
    %520 = vst [vmem:[#allocation9 + $0x58] sm:$0xff] %v512
    %521 = vst [vmem:[#allocation9 + $0x60] sm:$0xff] %v513
    %522 = vst [vmem:[#allocation9 + $0x68] sm:$0xff] %v514
    %523 = vst [vmem:[#allocation9 + $0x70] sm:$0xff] %v515
    %524 = vst [vmem:[#allocation9 + $0x78] sm:$0xff] %v516
    %v525 = vld [vmem:[#allocation7 + $0x80] sm:$0xff]
    %v526 = vld [vmem:[#allocation7 + $0x88] sm:$0xff]
    %v527 = vld [vmem:[#allocation7 + $0x90] sm:$0xff]
    %v528 = vld [vmem:[#allocation7 + $0x98] sm:$0xff]
    %v529 = vld [vmem:[#allocation7 + $0xa0] sm:$0xff]
    %v530 = vld [vmem:[#allocation7 + $0xa8] sm:$0xff]
    %v531 = vld [vmem:[#allocation7 + $0xb0] sm:$0xff]
    %v532 = vld [vmem:[#allocation7 + $0xb8] sm:$0xff]
    %v533 = vld [vmem:[#allocation6 + $0x80] sm:$0xff]
    %v534 = vld [vmem:[#allocation6 + $0x88] sm:$0xff]
    %v535 = vld [vmem:[#allocation6 + $0x90] sm:$0xff]
    %v536 = vld [vmem:[#allocation6 + $0x98] sm:$0xff]
    %v537 = vld [vmem:[#allocation6 + $0xa0] sm:$0xff]
    %v538 = vld [vmem:[#allocation6 + $0xa8] sm:$0xff]
    %v539 = vld [vmem:[#allocation6 + $0xb0] sm:$0xff]
    %v540 = vld [vmem:[#allocation6 + $0xb8] sm:$0xff]
    %v541 = vmul.f32 %v78, %v533
    %v542 = vmul.f32 %v78, %v534
    %v543 = vmul.f32 %v78, %v535
    %v544 = vmul.f32 %v78, %v536
    %v545 = vmul.f32 %v78, %v537
    %v546 = vmul.f32 %v78, %v538
    %v547 = vmul.f32 %v78, %v539
    %v548 = vmul.f32 %v78, %v540
    %v549 = vadd.f32 %v525, %v541
    %v550 = vadd.f32 %v526, %v542
    %v551 = vadd.f32 %v527, %v543
    %v552 = vadd.f32 %v528, %v544
    %v553 = vadd.f32 %v529, %v545
    %v554 = vadd.f32 %v530, %v546
    %v555 = vadd.f32 %v531, %v547
    %v556 = vadd.f32 %v532, %v548
    %v557 = vld [vmem:[%s95 + $0x80] sm:$0xff]
    %v558 = vld [vmem:[%s95 + $0x88] sm:$0xff]
    %v559 = vld [vmem:[%s95 + $0x90] sm:$0xff]
    %v560 = vld [vmem:[%s95 + $0x98] sm:$0xff]
    %v561 = vld [vmem:[%s95 + $0xa0] sm:$0xff]
    %v562 = vld [vmem:[%s95 + $0xa8] sm:$0xff]
    %v563 = vld [vmem:[%s95 + $0xb0] sm:$0xff]
    %v564 = vld [vmem:[%s95 + $0xb8] sm:$0xff]
    %v565 = vmul.f32 %v104, %v557
    %v566 = vmul.f32 %v104, %v558
    %v567 = vmul.f32 %v104, %v559
    %v568 = vmul.f32 %v104, %v560
    %v569 = vmul.f32 %v104, %v561
    %v570 = vmul.f32 %v104, %v562
    %v571 = vmul.f32 %v104, %v563
    %v572 = vmul.f32 %v104, %v564
    %v573 = vadd.f32 %v549, %v565
    %v574 = vadd.f32 %v550, %v566
    %v575 = vadd.f32 %v551, %v567
    %v576 = vadd.f32 %v552, %v568
    %v577 = vadd.f32 %v553, %v569
    %v578 = vadd.f32 %v554, %v570
    %v579 = vadd.f32 %v555, %v571
    %v580 = vadd.f32 %v556, %v572
    %v581 = vld [vmem:[%s121 + $0x80] sm:$0xff]
    %v582 = vld [vmem:[%s121 + $0x88] sm:$0xff]
    %v583 = vld [vmem:[%s121 + $0x90] sm:$0xff]
    %v584 = vld [vmem:[%s121 + $0x98] sm:$0xff]
    %v585 = vld [vmem:[%s121 + $0xa0] sm:$0xff]
    %v586 = vld [vmem:[%s121 + $0xa8] sm:$0xff]
    %v587 = vld [vmem:[%s121 + $0xb0] sm:$0xff]
    %v588 = vld [vmem:[%s121 + $0xb8] sm:$0xff]
    %v589 = vmul.f32 %v130, %v581
    %v590 = vmul.f32 %v130, %v582
    %v591 = vmul.f32 %v130, %v583
    %v592 = vmul.f32 %v130, %v584
    %v593 = vmul.f32 %v130, %v585
    %v594 = vmul.f32 %v130, %v586
    %v595 = vmul.f32 %v130, %v587
    %v596 = vmul.f32 %v130, %v588
    %v597 = vadd.f32 %v573, %v589
    %v598 = vadd.f32 %v574, %v590
    %v599 = vadd.f32 %v575, %v591
    %v600 = vadd.f32 %v576, %v592
    %v601 = vadd.f32 %v577, %v593
    %v602 = vadd.f32 %v578, %v594
    %v603 = vadd.f32 %v579, %v595
    %v604 = vadd.f32 %v580, %v596
    %v605 = vld [vmem:[%s147 + $0x80] sm:$0xff]
    %v606 = vld [vmem:[%s147 + $0x88] sm:$0xff]
    %v607 = vld [vmem:[%s147 + $0x90] sm:$0xff]
    %v608 = vld [vmem:[%s147 + $0x98] sm:$0xff]
    %v609 = vld [vmem:[%s147 + $0xa0] sm:$0xff]
    %v610 = vld [vmem:[%s147 + $0xa8] sm:$0xff]
    %v611 = vld [vmem:[%s147 + $0xb0] sm:$0xff]
    %v612 = vld [vmem:[%s147 + $0xb8] sm:$0xff]
    %v613 = vmul.f32 %v156, %v605
    %v614 = vmul.f32 %v156, %v606
    %v615 = vmul.f32 %v156, %v607
    %v616 = vmul.f32 %v156, %v608
    %v617 = vmul.f32 %v156, %v609
    %v618 = vmul.f32 %v156, %v610
    %v619 = vmul.f32 %v156, %v611
    %v620 = vmul.f32 %v156, %v612
    %v621 = vadd.f32 %v597, %v613
    %v622 = vadd.f32 %v598, %v614
    %v623 = vadd.f32 %v599, %v615
    %v624 = vadd.f32 %v600, %v616
    %v625 = vadd.f32 %v601, %v617
    %v626 = vadd.f32 %v602, %v618
    %v627 = vadd.f32 %v603, %v619
    %v628 = vadd.f32 %v604, %v620
    %v629 = vld [vmem:[%s173 + $0x80] sm:$0xff]
    %v630 = vld [vmem:[%s173 + $0x88] sm:$0xff]
    %v631 = vld [vmem:[%s173 + $0x90] sm:$0xff]
    %v632 = vld [vmem:[%s173 + $0x98] sm:$0xff]
    %v633 = vld [vmem:[%s173 + $0xa0] sm:$0xff]
    %v634 = vld [vmem:[%s173 + $0xa8] sm:$0xff]
    %v635 = vld [vmem:[%s173 + $0xb0] sm:$0xff]
    %v636 = vld [vmem:[%s173 + $0xb8] sm:$0xff]
    %v637 = vmul.f32 %v182, %v629
    %v638 = vmul.f32 %v182, %v630
    %v639 = vmul.f32 %v182, %v631
    %v640 = vmul.f32 %v182, %v632
    %v641 = vmul.f32 %v182, %v633
    %v642 = vmul.f32 %v182, %v634
    %v643 = vmul.f32 %v182, %v635
    %v644 = vmul.f32 %v182, %v636
    %v645 = vadd.f32 %v621, %v637
    %v646 = vadd.f32 %v622, %v638
    %v647 = vadd.f32 %v623, %v639
    %v648 = vadd.f32 %v624, %v640
    %v649 = vadd.f32 %v625, %v641
    %v650 = vadd.f32 %v626, %v642
    %v651 = vadd.f32 %v627, %v643
    %v652 = vadd.f32 %v628, %v644
    %v653 = vld [vmem:[%s199 + $0x80] sm:$0xff]
    %v654 = vld [vmem:[%s199 + $0x88] sm:$0xff]
    %v655 = vld [vmem:[%s199 + $0x90] sm:$0xff]
    %v656 = vld [vmem:[%s199 + $0x98] sm:$0xff]
    %v657 = vld [vmem:[%s199 + $0xa0] sm:$0xff]
    %v658 = vld [vmem:[%s199 + $0xa8] sm:$0xff]
    %v659 = vld [vmem:[%s199 + $0xb0] sm:$0xff]
    %v660 = vld [vmem:[%s199 + $0xb8] sm:$0xff]
    %v661 = vmul.f32 %v208, %v653
    %v662 = vmul.f32 %v208, %v654
    %v663 = vmul.f32 %v208, %v655
    %v664 = vmul.f32 %v208, %v656
    %v665 = vmul.f32 %v208, %v657
    %v666 = vmul.f32 %v208, %v658
    %v667 = vmul.f32 %v208, %v659
    %v668 = vmul.f32 %v208, %v660
    %v669 = vadd.f32 %v645, %v661
    %v670 = vadd.f32 %v646, %v662
    %v671 = vadd.f32 %v647, %v663
    %v672 = vadd.f32 %v648, %v664
    %v673 = vadd.f32 %v649, %v665
    %v674 = vadd.f32 %v650, %v666
    %v675 = vadd.f32 %v651, %v667
    %v676 = vadd.f32 %v652, %v668
    %v677 = vld [vmem:[%s225 + $0x80] sm:$0xff]
    %v678 = vld [vmem:[%s225 + $0x88] sm:$0xff]
    %v679 = vld [vmem:[%s225 + $0x90] sm:$0xff]
    %v680 = vld [vmem:[%s225 + $0x98] sm:$0xff]
    %v681 = vld [vmem:[%s225 + $0xa0] sm:$0xff]
    %v682 = vld [vmem:[%s225 + $0xa8] sm:$0xff]
    %v683 = vld [vmem:[%s225 + $0xb0] sm:$0xff]
    %v684 = vld [vmem:[%s225 + $0xb8] sm:$0xff]
    %v685 = vmul.f32 %v234, %v677
    %v686 = vmul.f32 %v234, %v678
    %v687 = vmul.f32 %v234, %v679
    %v688 = vmul.f32 %v234, %v680
    %v689 = vmul.f32 %v234, %v681
    %v690 = vmul.f32 %v234, %v682
    %v691 = vmul.f32 %v234, %v683
    %v692 = vmul.f32 %v234, %v684
    %v693 = vadd.f32 %v669, %v685
    %v694 = vadd.f32 %v670, %v686
    %v695 = vadd.f32 %v671, %v687
    %v696 = vadd.f32 %v672, %v688
    %v697 = vadd.f32 %v673, %v689
    %v698 = vadd.f32 %v674, %v690
    %v699 = vadd.f32 %v675, %v691
    %v700 = vadd.f32 %v676, %v692
    %v701 = vld [vmem:[%s251 + $0x80] sm:$0xff]
    %v702 = vld [vmem:[%s251 + $0x88] sm:$0xff]
    %v703 = vld [vmem:[%s251 + $0x90] sm:$0xff]
    %v704 = vld [vmem:[%s251 + $0x98] sm:$0xff]
    %v705 = vld [vmem:[%s251 + $0xa0] sm:$0xff]
    %v706 = vld [vmem:[%s251 + $0xa8] sm:$0xff]
    %v707 = vld [vmem:[%s251 + $0xb0] sm:$0xff]
    %v708 = vld [vmem:[%s251 + $0xb8] sm:$0xff]
    %v709 = vmul.f32 %v260, %v701
    %v710 = vmul.f32 %v260, %v702
    %v711 = vmul.f32 %v260, %v703
    %v712 = vmul.f32 %v260, %v704
    %v713 = vmul.f32 %v260, %v705
    %v714 = vmul.f32 %v260, %v706
    %v715 = vmul.f32 %v260, %v707
    %v716 = vmul.f32 %v260, %v708
    %v717 = vadd.f32 %v693, %v709
    %v718 = vadd.f32 %v694, %v710
    %v719 = vadd.f32 %v695, %v711
    %v720 = vadd.f32 %v696, %v712
    %v721 = vadd.f32 %v697, %v713
    %v722 = vadd.f32 %v698, %v714
    %v723 = vadd.f32 %v699, %v715
    %v724 = vadd.f32 %v700, %v716
    %v725 = vmax.f32 %v717, 0.0
    %v726 = vmax.f32 %v718, 0.0
    %v727 = vmax.f32 %v719, 0.0
    %v728 = vmax.f32 %v720, 0.0
    %v729 = vmax.f32 %v721, 0.0
    %v730 = vmax.f32 %v722, 0.0
    %v731 = vmax.f32 %v723, 0.0
    %v732 = vmax.f32 %v724, 0.0
    %v733 = vmin.f32 %v725, 1.0
    %v734 = vmin.f32 %v726, 1.0
    %v735 = vmin.f32 %v727, 1.0
    %v736 = vmin.f32 %v728, 1.0
    %v737 = vmin.f32 %v729, 1.0
    %v738 = vmin.f32 %v730, 1.0
    %v739 = vmin.f32 %v731, 1.0
    %v740 = vmin.f32 %v732, 1.0
    %741 = vst [vmem:[#allocation9 + $0x80] sm:$0xff] %v733
    %742 = vst [vmem:[#allocation9 + $0x88] sm:$0xff] %v734
    %743 = vst [vmem:[#allocation9 + $0x90] sm:$0xff] %v735
    %744 = vst [vmem:[#allocation9 + $0x98] sm:$0xff] %v736
    %745 = vst [vmem:[#allocation9 + $0xa0] sm:$0xff] %v737
    %746 = vst [vmem:[#allocation9 + $0xa8] sm:$0xff] %v738
    %747 = vst [vmem:[#allocation9 + $0xb0] sm:$0xff] %v739
    %748 = vst [vmem:[#allocation9 + $0xb8] sm:$0xff] %v740
    %v749 = vld [vmem:[#allocation7 + $0xc0] sm:$0xff]
    %v750 = vld [vmem:[#allocation7 + $0xc8] sm:$0xff]
    %v751 = vld [vmem:[#allocation7 + $0xd0] sm:$0xff]
    %v752 = vld [vmem:[#allocation7 + $0xd8] sm:$0xff]
    %v753 = vld [vmem:[#allocation7 + $0xe0] sm:$0xff]
    %v754 = vld [vmem:[#allocation6 + $0xc0] sm:$0xff]
    %v755 = vld [vmem:[#allocation6 + $0xc8] sm:$0xff]
    %v756 = vld [vmem:[#allocation6 + $0xd0] sm:$0xff]
    %v757 = vld [vmem:[#allocation6 + $0xd8] sm:$0xff]
    %v758 = vld [vmem:[#allocation6 + $0xe0] sm:$0xff]
    %v759 = vmul.f32 %v78, %v754
    %v760 = vmul.f32 %v78, %v755
    %v761 = vmul.f32 %v78, %v756
    %v762 = vmul.f32 %v78, %v757
    %v763 = vmul.f32 %v78, %v758
    %v764 = vadd.f32 %v749, %v759
    %v765 = vadd.f32 %v750, %v760
    %v766 = vadd.f32 %v751, %v761
    %v767 = vadd.f32 %v752, %v762
    %v768 = vadd.f32 %v753, %v763
    %v769 = vld [vmem:[%s95 + $0xc0] sm:$0xff]
    %v770 = vld [vmem:[%s95 + $0xc8] sm:$0xff]
    %v771 = vld [vmem:[%s95 + $0xd0] sm:$0xff]
    %v772 = vld [vmem:[%s95 + $0xd8] sm:$0xff]
    %v773 = vld [vmem:[%s95 + $0xe0] sm:$0xff]
    %v774 = vmul.f32 %v104, %v769
    %v775 = vmul.f32 %v104, %v770
    %v776 = vmul.f32 %v104, %v771
    %v777 = vmul.f32 %v104, %v772
    %v778 = vmul.f32 %v104, %v773
    %v779 = vadd.f32 %v764, %v774
    %v780 = vadd.f32 %v765, %v775
    %v781 = vadd.f32 %v766, %v776
    %v782 = vadd.f32 %v767, %v777
    %v783 = vadd.f32 %v768, %v778
    %v784 = vld [vmem:[%s121 + $0xc0] sm:$0xff]
    %v785 = vld [vmem:[%s121 + $0xc8] sm:$0xff]
    %v786 = vld [vmem:[%s121 + $0xd0] sm:$0xff]
    %v787 = vld [vmem:[%s121 + $0xd8] sm:$0xff]
    %v788 = vld [vmem:[%s121 + $0xe0] sm:$0xff]
    %v789 = vmul.f32 %v130, %v784
    %v790 = vmul.f32 %v130, %v785
    %v791 = vmul.f32 %v130, %v786
    %v792 = vmul.f32 %v130, %v787
    %v793 = vmul.f32 %v130, %v788
    %v794 = vadd.f32 %v779, %v789
    %v795 = vadd.f32 %v780, %v790
    %v796 = vadd.f32 %v781, %v791
    %v797 = vadd.f32 %v782, %v792
    %v798 = vadd.f32 %v783, %v793
    %v799 = vld [vmem:[%s147 + $0xc0] sm:$0xff]
    %v800 = vld [vmem:[%s147 + $0xc8] sm:$0xff]
    %v801 = vld [vmem:[%s147 + $0xd0] sm:$0xff]
    %v802 = vld [vmem:[%s147 + $0xd8] sm:$0xff]
    %v803 = vld [vmem:[%s147 + $0xe0] sm:$0xff]
    %v804 = vmul.f32 %v156, %v799
    %v805 = vmul.f32 %v156, %v800
    %v806 = vmul.f32 %v156, %v801
    %v807 = vmul.f32 %v156, %v802
    %v808 = vmul.f32 %v156, %v803
    %v809 = vadd.f32 %v794, %v804
    %v810 = vadd.f32 %v795, %v805
    %v811 = vadd.f32 %v796, %v806
    %v812 = vadd.f32 %v797, %v807
    %v813 = vadd.f32 %v798, %v808
    %v814 = vld [vmem:[%s173 + $0xc0] sm:$0xff]
    %v815 = vld [vmem:[%s173 + $0xc8] sm:$0xff]
    %v816 = vld [vmem:[%s173 + $0xd0] sm:$0xff]
    %v817 = vld [vmem:[%s173 + $0xd8] sm:$0xff]
    %v818 = vld [vmem:[%s173 + $0xe0] sm:$0xff]
    %v819 = vmul.f32 %v182, %v814
    %v820 = vmul.f32 %v182, %v815
    %v821 = vmul.f32 %v182, %v816
    %v822 = vmul.f32 %v182, %v817
    %v823 = vmul.f32 %v182, %v818
    %v824 = vadd.f32 %v809, %v819
    %v825 = vadd.f32 %v810, %v820
    %v826 = vadd.f32 %v811, %v821
    %v827 = vadd.f32 %v812, %v822
    %v828 = vadd.f32 %v813, %v823
    %v829 = vld [vmem:[%s199 + $0xc0] sm:$0xff]
    %v830 = vld [vmem:[%s199 + $0xc8] sm:$0xff]
    %v831 = vld [vmem:[%s199 + $0xd0] sm:$0xff]
    %v832 = vld [vmem:[%s199 + $0xd8] sm:$0xff]
    %v833 = vld [vmem:[%s199 + $0xe0] sm:$0xff]
    %v834 = vmul.f32 %v208, %v829
    %v835 = vmul.f32 %v208, %v830
    %v836 = vmul.f32 %v208, %v831
    %v837 = vmul.f32 %v208, %v832
    %v838 = vmul.f32 %v208, %v833
    %v839 = vadd.f32 %v824, %v834
    %v840 = vadd.f32 %v825, %v835
    %v841 = vadd.f32 %v826, %v836
    %v842 = vadd.f32 %v827, %v837
    %v843 = vadd.f32 %v828, %v838
    %v844 = vld [vmem:[%s225 + $0xc0] sm:$0xff]
    %v845 = vld [vmem:[%s225 + $0xc8] sm:$0xff]
    %v846 = vld [vmem:[%s225 + $0xd0] sm:$0xff]
    %v847 = vld [vmem:[%s225 + $0xd8] sm:$0xff]
    %v848 = vld [vmem:[%s225 + $0xe0] sm:$0xff]
    %v849 = vmul.f32 %v234, %v844
    %v850 = vmul.f32 %v234, %v845
    %v851 = vmul.f32 %v234, %v846
    %v852 = vmul.f32 %v234, %v847
    %v853 = vmul.f32 %v234, %v848
    %v854 = vadd.f32 %v839, %v849
    %v855 = vadd.f32 %v840, %v850
    %v856 = vadd.f32 %v841, %v851
    %v857 = vadd.f32 %v842, %v852
    %v858 = vadd.f32 %v843, %v853
    %v859 = vld [vmem:[%s251 + $0xc0] sm:$0xff]
    %v860 = vld [vmem:[%s251 + $0xc8] sm:$0xff]
    %v861 = vld [vmem:[%s251 + $0xd0] sm:$0xff]
    %v862 = vld [vmem:[%s251 + $0xd8] sm:$0xff]
    %v863 = vld [vmem:[%s251 + $0xe0] sm:$0xff]
    %v864 = vmul.f32 %v260, %v859
    %v865 = vmul.f32 %v260, %v860
    %v866 = vmul.f32 %v260, %v861
    %v867 = vmul.f32 %v260, %v862
    %v868 = vmul.f32 %v260, %v863
    %v869 = vadd.f32 %v854, %v864
    %v870 = vadd.f32 %v855, %v865
    %v871 = vadd.f32 %v856, %v866
    %v872 = vadd.f32 %v857, %v867
    %v873 = vadd.f32 %v858, %v868
    %v874 = vmax.f32 %v869, 0.0
    %v875 = vmax.f32 %v870, 0.0
    %v876 = vmax.f32 %v871, 0.0
    %v877 = vmax.f32 %v872, 0.0
    %v878 = vmax.f32 %v873, 0.0
    %v879 = vmin.f32 %v874, 1.0
    %v880 = vmin.f32 %v875, 1.0
    %v881 = vmin.f32 %v876, 1.0
    %v882 = vmin.f32 %v877, 1.0
    %v883 = vmin.f32 %v878, 1.0
    %884 = vst [vmem:[#allocation9 + $0xc0] sm:$0xff] %v879
    %885 = vst [vmem:[#allocation9 + $0xc8] sm:$0xff] %v880
    %886 = vst [vmem:[#allocation9 + $0xd0] sm:$0xff] %v881
    %887 = vst [vmem:[#allocation9 + $0xd8] sm:$0xff] %v882
    %888 = vst [vmem:[#allocation9 + $0xe0] sm:$0xff] %v883
    %s889 = sld [smem:[#allocation2 + $0x80]]
    %s890 = sld [smem:[#allocation2 + $0x81]]
    %s891 = sld [smem:[#allocation2 + $0x82]]
    %s892 = sld [smem:[#allocation2 + $0x83]]
    %s893 = sld [smem:[#allocation2 + $0x84]]
    %s894 = sld [smem:[#allocation2 + $0x85]]
    %s895 = sld [smem:[#allocation2 + $0x86]]
    %s896 = sld [smem:[#allocation2 + $0x87]]
    %v897 = vld [vmem:[#allocation7] sm:$0xff]
    %v898 = vld [vmem:[#allocation7 + $0x8] sm:$0xff]
    %v899 = vld [vmem:[#allocation7 + $0x10] sm:$0xff]
    %v900 = vld [vmem:[#allocation7 + $0x18] sm:$0xff]
    %v901 = vld [vmem:[#allocation7 + $0x20] sm:$0xff]
    %v902 = vld [vmem:[#allocation7 + $0x28] sm:$0xff]
    %v903 = vld [vmem:[#allocation7 + $0x30] sm:$0xff]
    %v904 = vld [vmem:[#allocation7 + $0x38] sm:$0xff]
    %v905 = vld [vmem:[#allocation6] sm:$0xff]
    %v906 = vld [vmem:[#allocation6 + $0x8] sm:$0xff]
    %v907 = vld [vmem:[#allocation6 + $0x10] sm:$0xff]
    %v908 = vld [vmem:[#allocation6 + $0x18] sm:$0xff]
    %v909 = vld [vmem:[#allocation6 + $0x20] sm:$0xff]
    %v910 = vld [vmem:[#allocation6 + $0x28] sm:$0xff]
    %v911 = vld [vmem:[#allocation6 + $0x30] sm:$0xff]
    %v912 = vld [vmem:[#allocation6 + $0x38] sm:$0xff]
    %v913 = vstv %s889
    %v914 = vmul.f32 %v913, %v905
    %v915 = vmul.f32 %v913, %v906
    %v916 = vmul.f32 %v913, %v907
    %v917 = vmul.f32 %v913, %v908
    %v918 = vmul.f32 %v913, %v909
    %v919 = vmul.f32 %v913, %v910
    %v920 = vmul.f32 %v913, %v911
    %v921 = vmul.f32 %v913, %v912
    %v922 = vadd.f32 %v897, %v914
    %v923 = vadd.f32 %v898, %v915
    %v924 = vadd.f32 %v899, %v916
    %v925 = vadd.f32 %v900, %v917
    %v926 = vadd.f32 %v901, %v918
    %v927 = vadd.f32 %v902, %v919
    %v928 = vadd.f32 %v903, %v920
    %v929 = vadd.f32 %v904, %v921
    %v930 = vld [vmem:[%s95] sm:$0xff]
    %v931 = vld [vmem:[%s95 + $0x8] sm:$0xff]
    %v932 = vld [vmem:[%s95 + $0x10] sm:$0xff]
    %v933 = vld [vmem:[%s95 + $0x18] sm:$0xff]
    %v934 = vld [vmem:[%s95 + $0x20] sm:$0xff]
    %v935 = vld [vmem:[%s95 + $0x28] sm:$0xff]
    %v936 = vld [vmem:[%s95 + $0x30] sm:$0xff]
    %v937 = vld [vmem:[%s95 + $0x38] sm:$0xff]
    %v938 = vstv %s890
    %v939 = vmul.f32 %v938, %v930
    %v940 = vmul.f32 %v938, %v931
    %v941 = vmul.f32 %v938, %v932
    %v942 = vmul.f32 %v938, %v933
    %v943 = vmul.f32 %v938, %v934
    %v944 = vmul.f32 %v938, %v935
    %v945 = vmul.f32 %v938, %v936
    %v946 = vmul.f32 %v938, %v937
    %v947 = vadd.f32 %v922, %v939
    %v948 = vadd.f32 %v923, %v940
    %v949 = vadd.f32 %v924, %v941
    %v950 = vadd.f32 %v925, %v942
    %v951 = vadd.f32 %v926, %v943
    %v952 = vadd.f32 %v927, %v944
    %v953 = vadd.f32 %v928, %v945
    %v954 = vadd.f32 %v929, %v946
    %v955 = vld [vmem:[%s121] sm:$0xff]
    %v956 = vld [vmem:[%s121 + $0x8] sm:$0xff]
    %v957 = vld [vmem:[%s121 + $0x10] sm:$0xff]
    %v958 = vld [vmem:[%s121 + $0x18] sm:$0xff]
    %v959 = vld [vmem:[%s121 + $0x20] sm:$0xff]
    %v960 = vld [vmem:[%s121 + $0x28] sm:$0xff]
    %v961 = vld [vmem:[%s121 + $0x30] sm:$0xff]
    %v962 = vld [vmem:[%s121 + $0x38] sm:$0xff]
    %v963 = vstv %s891
    %v964 = vmul.f32 %v963, %v955
    %v965 = vmul.f32 %v963, %v956
    %v966 = vmul.f32 %v963, %v957
    %v967 = vmul.f32 %v963, %v958
    %v968 = vmul.f32 %v963, %v959
    %v969 = vmul.f32 %v963, %v960
    %v970 = vmul.f32 %v963, %v961
    %v971 = vmul.f32 %v963, %v962
    %v972 = vadd.f32 %v947, %v964
    %v973 = vadd.f32 %v948, %v965
    %v974 = vadd.f32 %v949, %v966
    %v975 = vadd.f32 %v950, %v967
    %v976 = vadd.f32 %v951, %v968
    %v977 = vadd.f32 %v952, %v969
    %v978 = vadd.f32 %v953, %v970
    %v979 = vadd.f32 %v954, %v971
    %v980 = vld [vmem:[%s147] sm:$0xff]
    %v981 = vld [vmem:[%s147 + $0x8] sm:$0xff]
    %v982 = vld [vmem:[%s147 + $0x10] sm:$0xff]
    %v983 = vld [vmem:[%s147 + $0x18] sm:$0xff]
    %v984 = vld [vmem:[%s147 + $0x20] sm:$0xff]
    %v985 = vld [vmem:[%s147 + $0x28] sm:$0xff]
    %v986 = vld [vmem:[%s147 + $0x30] sm:$0xff]
    %v987 = vld [vmem:[%s147 + $0x38] sm:$0xff]
    %v988 = vstv %s892
    %v989 = vmul.f32 %v988, %v980
    %v990 = vmul.f32 %v988, %v981
    %v991 = vmul.f32 %v988, %v982
    %v992 = vmul.f32 %v988, %v983
    %v993 = vmul.f32 %v988, %v984
    %v994 = vmul.f32 %v988, %v985
    %v995 = vmul.f32 %v988, %v986
    %v996 = vmul.f32 %v988, %v987
    %v997 = vadd.f32 %v972, %v989
    %v998 = vadd.f32 %v973, %v990
    %v999 = vadd.f32 %v974, %v991
    %v1000 = vadd.f32 %v975, %v992
    %v1001 = vadd.f32 %v976, %v993
    %v1002 = vadd.f32 %v977, %v994
    %v1003 = vadd.f32 %v978, %v995
    %v1004 = vadd.f32 %v979, %v996
    %v1005 = vld [vmem:[%s173] sm:$0xff]
    %v1006 = vld [vmem:[%s173 + $0x8] sm:$0xff]
    %v1007 = vld [vmem:[%s173 + $0x10] sm:$0xff]
    %v1008 = vld [vmem:[%s173 + $0x18] sm:$0xff]
    %v1009 = vld [vmem:[%s173 + $0x20] sm:$0xff]
    %v1010 = vld [vmem:[%s173 + $0x28] sm:$0xff]
    %v1011 = vld [vmem:[%s173 + $0x30] sm:$0xff]
    %v1012 = vld [vmem:[%s173 + $0x38] sm:$0xff]
    %v1013 = vstv %s893
    %v1014 = vmul.f32 %v1013, %v1005
    %v1015 = vmul.f32 %v1013, %v1006
    %v1016 = vmul.f32 %v1013, %v1007
    %v1017 = vmul.f32 %v1013, %v1008
    %v1018 = vmul.f32 %v1013, %v1009
    %v1019 = vmul.f32 %v1013, %v1010
    %v1020 = vmul.f32 %v1013, %v1011
    %v1021 = vmul.f32 %v1013, %v1012
    %v1022 = vadd.f32 %v997, %v1014
    %v1023 = vadd.f32 %v998, %v1015
    %v1024 = vadd.f32 %v999, %v1016
    %v1025 = vadd.f32 %v1000, %v1017
    %v1026 = vadd.f32 %v1001, %v1018
    %v1027 = vadd.f32 %v1002, %v1019
    %v1028 = vadd.f32 %v1003, %v1020
    %v1029 = vadd.f32 %v1004, %v1021
    %v1030 = vld [vmem:[%s199] sm:$0xff]
    %v1031 = vld [vmem:[%s199 + $0x8] sm:$0xff]
    %v1032 = vld [vmem:[%s199 + $0x10] sm:$0xff]
    %v1033 = vld [vmem:[%s199 + $0x18] sm:$0xff]
    %v1034 = vld [vmem:[%s199 + $0x20] sm:$0xff]
    %v1035 = vld [vmem:[%s199 + $0x28] sm:$0xff]
    %v1036 = vld [vmem:[%s199 + $0x30] sm:$0xff]
    %v1037 = vld [vmem:[%s199 + $0x38] sm:$0xff]
    %v1038 = vstv %s894
    %v1039 = vmul.f32 %v1038, %v1030
    %v1040 = vmul.f32 %v1038, %v1031
    %v1041 = vmul.f32 %v1038, %v1032
    %v1042 = vmul.f32 %v1038, %v1033
    %v1043 = vmul.f32 %v1038, %v1034
    %v1044 = vmul.f32 %v1038, %v1035
    %v1045 = vmul.f32 %v1038, %v1036
    %v1046 = vmul.f32 %v1038, %v1037
    %v1047 = vadd.f32 %v1022, %v1039
    %v1048 = vadd.f32 %v1023, %v1040
    %v1049 = vadd.f32 %v1024, %v1041
    %v1050 = vadd.f32 %v1025, %v1042
    %v1051 = vadd.f32 %v1026, %v1043
    %v1052 = vadd.f32 %v1027, %v1044
    %v1053 = vadd.f32 %v1028, %v1045
    %v1054 = vadd.f32 %v1029, %v1046
    %v1055 = vld [vmem:[%s225] sm:$0xff]
    %v1056 = vld [vmem:[%s225 + $0x8] sm:$0xff]
    %v1057 = vld [vmem:[%s225 + $0x10] sm:$0xff]
    %v1058 = vld [vmem:[%s225 + $0x18] sm:$0xff]
    %v1059 = vld [vmem:[%s225 + $0x20] sm:$0xff]
    %v1060 = vld [vmem:[%s225 + $0x28] sm:$0xff]
    %v1061 = vld [vmem:[%s225 + $0x30] sm:$0xff]
    %v1062 = vld [vmem:[%s225 + $0x38] sm:$0xff]
    %v1063 = vstv %s895
    %v1064 = vmul.f32 %v1063, %v1055
    %v1065 = vmul.f32 %v1063, %v1056
    %v1066 = vmul.f32 %v1063, %v1057
    %v1067 = vmul.f32 %v1063, %v1058
    %v1068 = vmul.f32 %v1063, %v1059
    %v1069 = vmul.f32 %v1063, %v1060
    %v1070 = vmul.f32 %v1063, %v1061
    %v1071 = vmul.f32 %v1063, %v1062
    %v1072 = vadd.f32 %v1047, %v1064
    %v1073 = vadd.f32 %v1048, %v1065
    %v1074 = vadd.f32 %v1049, %v1066
    %v1075 = vadd.f32 %v1050, %v1067
    %v1076 = vadd.f32 %v1051, %v1068
    %v1077 = vadd.f32 %v1052, %v1069
    %v1078 = vadd.f32 %v1053, %v1070
    %v1079 = vadd.f32 %v1054, %v1071
    %v1080 = vld [vmem:[%s251] sm:$0xff]
    %v1081 = vld [vmem:[%s251 + $0x8] sm:$0xff]
    %v1082 = vld [vmem:[%s251 + $0x10] sm:$0xff]
    %v1083 = vld [vmem:[%s251 + $0x18] sm:$0xff]
    %v1084 = vld [vmem:[%s251 + $0x20] sm:$0xff]
    %v1085 = vld [vmem:[%s251 + $0x28] sm:$0xff]
    %v1086 = vld [vmem:[%s251 + $0x30] sm:$0xff]
    %v1087 = vld [vmem:[%s251 + $0x38] sm:$0xff]
    %v1088 = vstv %s896
    %v1089 = vmul.f32 %v1088, %v1080
    %v1090 = vmul.f32 %v1088, %v1081
    %v1091 = vmul.f32 %v1088, %v1082
    %v1092 = vmul.f32 %v1088, %v1083
    %v1093 = vmul.f32 %v1088, %v1084
    %v1094 = vmul.f32 %v1088, %v1085
    %v1095 = vmul.f32 %v1088, %v1086
    %v1096 = vmul.f32 %v1088, %v1087
    %v1097 = vadd.f32 %v1072, %v1089
    %v1098 = vadd.f32 %v1073, %v1090
    %v1099 = vadd.f32 %v1074, %v1091
    %v1100 = vadd.f32 %v1075, %v1092
    %v1101 = vadd.f32 %v1076, %v1093
    %v1102 = vadd.f32 %v1077, %v1094
    %v1103 = vadd.f32 %v1078, %v1095
    %v1104 = vadd.f32 %v1079, %v1096
    %v1105 = vmax.f32 %v1097, 0.0
    %v1106 = vmax.f32 %v1098, 0.0
    %v1107 = vmax.f32 %v1099, 0.0
    %v1108 = vmax.f32 %v1100, 0.0
    %v1109 = vmax.f32 %v1101, 0.0
    %v1110 = vmax.f32 %v1102, 0.0
    %v1111 = vmax.f32 %v1103, 0.0
    %v1112 = vmax.f32 %v1104, 0.0
    %v1113 = vmin.f32 %v1105, 1.0
    %v1114 = vmin.f32 %v1106, 1.0
    %v1115 = vmin.f32 %v1107, 1.0
    %v1116 = vmin.f32 %v1108, 1.0
    %v1117 = vmin.f32 %v1109, 1.0
    %v1118 = vmin.f32 %v1110, 1.0
    %v1119 = vmin.f32 %v1111, 1.0
    %v1120 = vmin.f32 %v1112, 1.0
    %s1121 = scalar_lea.vmem [#allocation9], 232
    %1122 = vst [vmem:[%s1121] sm:$0xff] %v1113
    %1123 = vst [vmem:[%s1121 + $0x8] sm:$0xff] %v1114
    %1124 = vst [vmem:[%s1121 + $0x10] sm:$0xff] %v1115
    %1125 = vst [vmem:[%s1121 + $0x18] sm:$0xff] %v1116
    %1126 = vst [vmem:[%s1121 + $0x20] sm:$0xff] %v1117
    %1127 = vst [vmem:[%s1121 + $0x28] sm:$0xff] %v1118
    %1128 = vst [vmem:[%s1121 + $0x30] sm:$0xff] %v1119
    %1129 = vst [vmem:[%s1121 + $0x38] sm:$0xff] %v1120
    %v1130 = vld [vmem:[#allocation7 + $0x40] sm:$0xff]
    %v1131 = vld [vmem:[#allocation7 + $0x48] sm:$0xff]
    %v1132 = vld [vmem:[#allocation7 + $0x50] sm:$0xff]
    %v1133 = vld [vmem:[#allocation7 + $0x58] sm:$0xff]
    %v1134 = vld [vmem:[#allocation7 + $0x60] sm:$0xff]
    %v1135 = vld [vmem:[#allocation7 + $0x68] sm:$0xff]
    %v1136 = vld [vmem:[#allocation7 + $0x70] sm:$0xff]
    %v1137 = vld [vmem:[#allocation7 + $0x78] sm:$0xff]
    %v1138 = vld [vmem:[#allocation6 + $0x40] sm:$0xff]
    %v1139 = vld [vmem:[#allocation6 + $0x48] sm:$0xff]
    %v1140 = vld [vmem:[#allocation6 + $0x50] sm:$0xff]
    %v1141 = vld [vmem:[#allocation6 + $0x58] sm:$0xff]
    %v1142 = vld [vmem:[#allocation6 + $0x60] sm:$0xff]
    %v1143 = vld [vmem:[#allocation6 + $0x68] sm:$0xff]
    %v1144 = vld [vmem:[#allocation6 + $0x70] sm:$0xff]
    %v1145 = vld [vmem:[#allocation6 + $0x78] sm:$0xff]
    %v1146 = vmul.f32 %v913, %v1138
    %v1147 = vmul.f32 %v913, %v1139
    %v1148 = vmul.f32 %v913, %v1140
    %v1149 = vmul.f32 %v913, %v1141
    %v1150 = vmul.f32 %v913, %v1142
    %v1151 = vmul.f32 %v913, %v1143
    %v1152 = vmul.f32 %v913, %v1144
    %v1153 = vmul.f32 %v913, %v1145
    %v1154 = vadd.f32 %v1130, %v1146
    %v1155 = vadd.f32 %v1131, %v1147
    %v1156 = vadd.f32 %v1132, %v1148
    %v1157 = vadd.f32 %v1133, %v1149
    %v1158 = vadd.f32 %v1134, %v1150
    %v1159 = vadd.f32 %v1135, %v1151
    %v1160 = vadd.f32 %v1136, %v1152
    %v1161 = vadd.f32 %v1137, %v1153
    %v1162 = vld [vmem:[%s95 + $0x40] sm:$0xff]
    %v1163 = vld [vmem:[%s95 + $0x48] sm:$0xff]
    %v1164 = vld [vmem:[%s95 + $0x50] sm:$0xff]
    %v1165 = vld [vmem:[%s95 + $0x58] sm:$0xff]
    %v1166 = vld [vmem:[%s95 + $0x60] sm:$0xff]
    %v1167 = vld [vmem:[%s95 + $0x68] sm:$0xff]
    %v1168 = vld [vmem:[%s95 + $0x70] sm:$0xff]
    %v1169 = vld [vmem:[%s95 + $0x78] sm:$0xff]
    %v1170 = vmul.f32 %v938, %v1162
    %v1171 = vmul.f32 %v938, %v1163
    %v1172 = vmul.f32 %v938, %v1164
    %v1173 = vmul.f32 %v938, %v1165
    %v1174 = vmul.f32 %v938, %v1166
    %v1175 = vmul.f32 %v938, %v1167
    %v1176 = vmul.f32 %v938, %v1168
    %v1177 = vmul.f32 %v938, %v1169
    %v1178 = vadd.f32 %v1154, %v1170
    %v1179 = vadd.f32 %v1155, %v1171
    %v1180 = vadd.f32 %v1156, %v1172
    %v1181 = vadd.f32 %v1157, %v1173
    %v1182 = vadd.f32 %v1158, %v1174
    %v1183 = vadd.f32 %v1159, %v1175
    %v1184 = vadd.f32 %v1160, %v1176
    %v1185 = vadd.f32 %v1161, %v1177
    %v1186 = vld [vmem:[%s121 + $0x40] sm:$0xff]
    %v1187 = vld [vmem:[%s121 + $0x48] sm:$0xff]
    %v1188 = vld [vmem:[%s121 + $0x50] sm:$0xff]
    %v1189 = vld [vmem:[%s121 + $0x58] sm:$0xff]
    %v1190 = vld [vmem:[%s121 + $0x60] sm:$0xff]
    %v1191 = vld [vmem:[%s121 + $0x68] sm:$0xff]
    %v1192 = vld [vmem:[%s121 + $0x70] sm:$0xff]
    %v1193 = vld [vmem:[%s121 + $0x78] sm:$0xff]
    %v1194 = vmul.f32 %v963, %v1186
    %v1195 = vmul.f32 %v963, %v1187
    %v1196 = vmul.f32 %v963, %v1188
    %v1197 = vmul.f32 %v963, %v1189
    %v1198 = vmul.f32 %v963, %v1190
    %v1199 = vmul.f32 %v963, %v1191
    %v1200 = vmul.f32 %v963, %v1192
    %v1201 = vmul.f32 %v963, %v1193
    %v1202 = vadd.f32 %v1178, %v1194
    %v1203 = vadd.f32 %v1179, %v1195
    %v1204 = vadd.f32 %v1180, %v1196
    %v1205 = vadd.f32 %v1181, %v1197
    %v1206 = vadd.f32 %v1182, %v1198
    %v1207 = vadd.f32 %v1183, %v1199
    %v1208 = vadd.f32 %v1184, %v1200
    %v1209 = vadd.f32 %v1185, %v1201
    %v1210 = vld [vmem:[%s147 + $0x40] sm:$0xff]
    %v1211 = vld [vmem:[%s147 + $0x48] sm:$0xff]
    %v1212 = vld [vmem:[%s147 + $0x50] sm:$0xff]
    %v1213 = vld [vmem:[%s147 + $0x58] sm:$0xff]
    %v1214 = vld [vmem:[%s147 + $0x60] sm:$0xff]
    %v1215 = vld [vmem:[%s147 + $0x68] sm:$0xff]
    %v1216 = vld [vmem:[%s147 + $0x70] sm:$0xff]
    %v1217 = vld [vmem:[%s147 + $0x78] sm:$0xff]
    %v1218 = vmul.f32 %v988, %v1210
    %v1219 = vmul.f32 %v988, %v1211
    %v1220 = vmul.f32 %v988, %v1212
    %v1221 = vmul.f32 %v988, %v1213
    %v1222 = vmul.f32 %v988, %v1214
    %v1223 = vmul.f32 %v988, %v1215
    %v1224 = vmul.f32 %v988, %v1216
    %v1225 = vmul.f32 %v988, %v1217
    %v1226 = vadd.f32 %v1202, %v1218
    %v1227 = vadd.f32 %v1203, %v1219
    %v1228 = vadd.f32 %v1204, %v1220
    %v1229 = vadd.f32 %v1205, %v1221
    %v1230 = vadd.f32 %v1206, %v1222
    %v1231 = vadd.f32 %v1207, %v1223
    %v1232 = vadd.f32 %v1208, %v1224
    %v1233 = vadd.f32 %v1209, %v1225
    %v1234 = vld [vmem:[%s173 + $0x40] sm:$0xff]
    %v1235 = vld [vmem:[%s173 + $0x48] sm:$0xff]
    %v1236 = vld [vmem:[%s173 + $0x50] sm:$0xff]
    %v1237 = vld [vmem:[%s173 + $0x58] sm:$0xff]
    %v1238 = vld [vmem:[%s173 + $0x60] sm:$0xff]
    %v1239 = vld [vmem:[%s173 + $0x68] sm:$0xff]
    %v1240 = vld [vmem:[%s173 + $0x70] sm:$0xff]
    %v1241 = vld [vmem:[%s173 + $0x78] sm:$0xff]
    %v1242 = vmul.f32 %v1013, %v1234
    %v1243 = vmul.f32 %v1013, %v1235
    %v1244 = vmul.f32 %v1013, %v1236
    %v1245 = vmul.f32 %v1013, %v1237
    %v1246 = vmul.f32 %v1013, %v1238
    %v1247 = vmul.f32 %v1013, %v1239
    %v1248 = vmul.f32 %v1013, %v1240
    %v1249 = vmul.f32 %v1013, %v1241
    %v1250 = vadd.f32 %v1226, %v1242
    %v1251 = vadd.f32 %v1227, %v1243
    %v1252 = vadd.f32 %v1228, %v1244
    %v1253 = vadd.f32 %v1229, %v1245
    %v1254 = vadd.f32 %v1230, %v1246
    %v1255 = vadd.f32 %v1231, %v1247
    %v1256 = vadd.f32 %v1232, %v1248
    %v1257 = vadd.f32 %v1233, %v1249
    %v1258 = vld [vmem:[%s199 + $0x40] sm:$0xff]
    %v1259 = vld [vmem:[%s199 + $0x48] sm:$0xff]
    %v1260 = vld [vmem:[%s199 + $0x50] sm:$0xff]
    %v1261 = vld [vmem:[%s199 + $0x58] sm:$0xff]
    %v1262 = vld [vmem:[%s199 + $0x60] sm:$0xff]
    %v1263 = vld [vmem:[%s199 + $0x68] sm:$0xff]
    %v1264 = vld [vmem:[%s199 + $0x70] sm:$0xff]
    %v1265 = vld [vmem:[%s199 + $0x78] sm:$0xff]
    %v1266 = vmul.f32 %v1038, %v1258
    %v1267 = vmul.f32 %v1038, %v1259
    %v1268 = vmul.f32 %v1038, %v1260
    %v1269 = vmul.f32 %v1038, %v1261
    %v1270 = vmul.f32 %v1038, %v1262
    %v1271 = vmul.f32 %v1038, %v1263
    %v1272 = vmul.f32 %v1038, %v1264
    %v1273 = vmul.f32 %v1038, %v1265
    %v1274 = vadd.f32 %v1250, %v1266
    %v1275 = vadd.f32 %v1251, %v1267
    %v1276 = vadd.f32 %v1252, %v1268
    %v1277 = vadd.f32 %v1253, %v1269
    %v1278 = vadd.f32 %v1254, %v1270
    %v1279 = vadd.f32 %v1255, %v1271
    %v1280 = vadd.f32 %v1256, %v1272
    %v1281 = vadd.f32 %v1257, %v1273
    %v1282 = vld [vmem:[%s225 + $0x40] sm:$0xff]
    %v1283 = vld [vmem:[%s225 + $0x48] sm:$0xff]
    %v1284 = vld [vmem:[%s225 + $0x50] sm:$0xff]
    %v1285 = vld [vmem:[%s225 + $0x58] sm:$0xff]
    %v1286 = vld [vmem:[%s225 + $0x60] sm:$0xff]
    %v1287 = vld [vmem:[%s225 + $0x68] sm:$0xff]
    %v1288 = vld [vmem:[%s225 + $0x70] sm:$0xff]
    %v1289 = vld [vmem:[%s225 + $0x78] sm:$0xff]
    %v1290 = vmul.f32 %v1063, %v1282
    %v1291 = vmul.f32 %v1063, %v1283
    %v1292 = vmul.f32 %v1063, %v1284
    %v1293 = vmul.f32 %v1063, %v1285
    %v1294 = vmul.f32 %v1063, %v1286
    %v1295 = vmul.f32 %v1063, %v1287
    %v1296 = vmul.f32 %v1063, %v1288
    %v1297 = vmul.f32 %v1063, %v1289
    %v1298 = vadd.f32 %v1274, %v1290
    %v1299 = vadd.f32 %v1275, %v1291
    %v1300 = vadd.f32 %v1276, %v1292
    %v1301 = vadd.f32 %v1277, %v1293
    %v1302 = vadd.f32 %v1278, %v1294
    %v1303 = vadd.f32 %v1279, %v1295
    %v1304 = vadd.f32 %v1280, %v1296
    %v1305 = vadd.f32 %v1281, %v1297
    %v1306 = vld [vmem:[%s251 + $0x40] sm:$0xff]
    %v1307 = vld [vmem:[%s251 + $0x48] sm:$0xff]
    %v1308 = vld [vmem:[%s251 + $0x50] sm:$0xff]
    %v1309 = vld [vmem:[%s251 + $0x58] sm:$0xff]
    %v1310 = vld [vmem:[%s251 + $0x60] sm:$0xff]
    %v1311 = vld [vmem:[%s251 + $0x68] sm:$0xff]
    %v1312 = vld [vmem:[%s251 + $0x70] sm:$0xff]
    %v1313 = vld [vmem:[%s251 + $0x78] sm:$0xff]
    %v1314 = vmul.f32 %v1088, %v1306
    %v1315 = vmul.f32 %v1088, %v1307
    %v1316 = vmul.f32 %v1088, %v1308
    %v1317 = vmul.f32 %v1088, %v1309
    %v1318 = vmul.f32 %v1088, %v1310
    %v1319 = vmul.f32 %v1088, %v1311
    %v1320 = vmul.f32 %v1088, %v1312
    %v1321 = vmul.f32 %v1088, %v1313
    %v1322 = vadd.f32 %v1298, %v1314
    %v1323 = vadd.f32 %v1299, %v1315
    %v1324 = vadd.f32 %v1300, %v1316
    %v1325 = vadd.f32 %v1301, %v1317
    %v1326 = vadd.f32 %v1302, %v1318
    %v1327 = vadd.f32 %v1303, %v1319
    %v1328 = vadd.f32 %v1304, %v1320
    %v1329 = vadd.f32 %v1305, %v1321
    %v1330 = vmax.f32 %v1322, 0.0
    %v1331 = vmax.f32 %v1323, 0.0
    %v1332 = vmax.f32 %v1324, 0.0
    %v1333 = vmax.f32 %v1325, 0.0
    %v1334 = vmax.f32 %v1326, 0.0
    %v1335 = vmax.f32 %v1327, 0.0
    %v1336 = vmax.f32 %v1328, 0.0
    %v1337 = vmax.f32 %v1329, 0.0
    %v1338 = vmin.f32 %v1330, 1.0
    %v1339 = vmin.f32 %v1331, 1.0
    %v1340 = vmin.f32 %v1332, 1.0
    %v1341 = vmin.f32 %v1333, 1.0
    %v1342 = vmin.f32 %v1334, 1.0
    %v1343 = vmin.f32 %v1335, 1.0
    %v1344 = vmin.f32 %v1336, 1.0
    %v1345 = vmin.f32 %v1337, 1.0
    %1346 = vst [vmem:[%s1121 + $0x40] sm:$0xff] %v1338
    %1347 = vst [vmem:[%s1121 + $0x48] sm:$0xff] %v1339
    %1348 = vst [vmem:[%s1121 + $0x50] sm:$0xff] %v1340
    %1349 = vst [vmem:[%s1121 + $0x58] sm:$0xff] %v1341
    %1350 = vst [vmem:[%s1121 + $0x60] sm:$0xff] %v1342
    %1351 = vst [vmem:[%s1121 + $0x68] sm:$0xff] %v1343
    %1352 = vst [vmem:[%s1121 + $0x70] sm:$0xff] %v1344
    %1353 = vst [vmem:[%s1121 + $0x78] sm:$0xff] %v1345
    %v1354 = vld [vmem:[#allocation7 + $0x80] sm:$0xff]
    %v1355 = vld [vmem:[#allocation7 + $0x88] sm:$0xff]
    %v1356 = vld [vmem:[#allocation7 + $0x90] sm:$0xff]
    %v1357 = vld [vmem:[#allocation7 + $0x98] sm:$0xff]
    %v1358 = vld [vmem:[#allocation7 + $0xa0] sm:$0xff]
    %v1359 = vld [vmem:[#allocation7 + $0xa8] sm:$0xff]
    %v1360 = vld [vmem:[#allocation7 + $0xb0] sm:$0xff]
    %v1361 = vld [vmem:[#allocation7 + $0xb8] sm:$0xff]
    %v1362 = vld [vmem:[#allocation6 + $0x80] sm:$0xff]
    %v1363 = vld [vmem:[#allocation6 + $0x88] sm:$0xff]
    %v1364 = vld [vmem:[#allocation6 + $0x90] sm:$0xff]
    %v1365 = vld [vmem:[#allocation6 + $0x98] sm:$0xff]
    %v1366 = vld [vmem:[#allocation6 + $0xa0] sm:$0xff]
    %v1367 = vld [vmem:[#allocation6 + $0xa8] sm:$0xff]
    %v1368 = vld [vmem:[#allocation6 + $0xb0] sm:$0xff]
    %v1369 = vld [vmem:[#allocation6 + $0xb8] sm:$0xff]
    %v1370 = vmul.f32 %v913, %v1362
    %v1371 = vmul.f32 %v913, %v1363
    %v1372 = vmul.f32 %v913, %v1364
    %v1373 = vmul.f32 %v913, %v1365
    %v1374 = vmul.f32 %v913, %v1366
    %v1375 = vmul.f32 %v913, %v1367
    %v1376 = vmul.f32 %v913, %v1368
    %v1377 = vmul.f32 %v913, %v1369
    %v1378 = vadd.f32 %v1354, %v1370
    %v1379 = vadd.f32 %v1355, %v1371
    %v1380 = vadd.f32 %v1356, %v1372
    %v1381 = vadd.f32 %v1357, %v1373
    %v1382 = vadd.f32 %v1358, %v1374
    %v1383 = vadd.f32 %v1359, %v1375
    %v1384 = vadd.f32 %v1360, %v1376
    %v1385 = vadd.f32 %v1361, %v1377
    %v1386 = vld [vmem:[%s95 + $0x80] sm:$0xff]
    %v1387 = vld [vmem:[%s95 + $0x88] sm:$0xff]
    %v1388 = vld [vmem:[%s95 + $0x90] sm:$0xff]
    %v1389 = vld [vmem:[%s95 + $0x98] sm:$0xff]
    %v1390 = vld [vmem:[%s95 + $0xa0] sm:$0xff]
    %v1391 = vld [vmem:[%s95 + $0xa8] sm:$0xff]
    %v1392 = vld [vmem:[%s95 + $0xb0] sm:$0xff]
    %v1393 = vld [vmem:[%s95 + $0xb8] sm:$0xff]
    %v1394 = vmul.f32 %v938, %v1386
    %v1395 = vmul.f32 %v938, %v1387
    %v1396 = vmul.f32 %v938, %v1388
    %v1397 = vmul.f32 %v938, %v1389
    %v1398 = vmul.f32 %v938, %v1390
    %v1399 = vmul.f32 %v938, %v1391
    %v1400 = vmul.f32 %v938, %v1392
    %v1401 = vmul.f32 %v938, %v1393
    %v1402 = vadd.f32 %v1378, %v1394
    %v1403 = vadd.f32 %v1379, %v1395
    %v1404 = vadd.f32 %v1380, %v1396
    %v1405 = vadd.f32 %v1381, %v1397
    %v1406 = vadd.f32 %v1382, %v1398
    %v1407 = vadd.f32 %v1383, %v1399
    %v1408 = vadd.f32 %v1384, %v1400
    %v1409 = vadd.f32 %v1385, %v1401
    %v1410 = vld [vmem:[%s121 + $0x80] sm:$0xff]
    %v1411 = vld [vmem:[%s121 + $0x88] sm:$0xff]
    %v1412 = vld [vmem:[%s121 + $0x90] sm:$0xff]
    %v1413 = vld [vmem:[%s121 + $0x98] sm:$0xff]
    %v1414 = vld [vmem:[%s121 + $0xa0] sm:$0xff]
    %v1415 = vld [vmem:[%s121 + $0xa8] sm:$0xff]
    %v1416 = vld [vmem:[%s121 + $0xb0] sm:$0xff]
    %v1417 = vld [vmem:[%s121 + $0xb8] sm:$0xff]
    %v1418 = vmul.f32 %v963, %v1410
    %v1419 = vmul.f32 %v963, %v1411
    %v1420 = vmul.f32 %v963, %v1412
    %v1421 = vmul.f32 %v963, %v1413
    %v1422 = vmul.f32 %v963, %v1414
    %v1423 = vmul.f32 %v963, %v1415
    %v1424 = vmul.f32 %v963, %v1416
    %v1425 = vmul.f32 %v963, %v1417
    %v1426 = vadd.f32 %v1402, %v1418
    %v1427 = vadd.f32 %v1403, %v1419
    %v1428 = vadd.f32 %v1404, %v1420
    %v1429 = vadd.f32 %v1405, %v1421
    %v1430 = vadd.f32 %v1406, %v1422
    %v1431 = vadd.f32 %v1407, %v1423
    %v1432 = vadd.f32 %v1408, %v1424
    %v1433 = vadd.f32 %v1409, %v1425
    %v1434 = vld [vmem:[%s147 + $0x80] sm:$0xff]
    %v1435 = vld [vmem:[%s147 + $0x88] sm:$0xff]
    %v1436 = vld [vmem:[%s147 + $0x90] sm:$0xff]
    %v1437 = vld [vmem:[%s147 + $0x98] sm:$0xff]
    %v1438 = vld [vmem:[%s147 + $0xa0] sm:$0xff]
    %v1439 = vld [vmem:[%s147 + $0xa8] sm:$0xff]
    %v1440 = vld [vmem:[%s147 + $0xb0] sm:$0xff]
    %v1441 = vld [vmem:[%s147 + $0xb8] sm:$0xff]
    %v1442 = vmul.f32 %v988, %v1434
    %v1443 = vmul.f32 %v988, %v1435
    %v1444 = vmul.f32 %v988, %v1436
    %v1445 = vmul.f32 %v988, %v1437
    %v1446 = vmul.f32 %v988, %v1438
    %v1447 = vmul.f32 %v988, %v1439
    %v1448 = vmul.f32 %v988, %v1440
    %v1449 = vmul.f32 %v988, %v1441
    %v1450 = vadd.f32 %v1426, %v1442
    %v1451 = vadd.f32 %v1427, %v1443
    %v1452 = vadd.f32 %v1428, %v1444
    %v1453 = vadd.f32 %v1429, %v1445
    %v1454 = vadd.f32 %v1430, %v1446
    %v1455 = vadd.f32 %v1431, %v1447
    %v1456 = vadd.f32 %v1432, %v1448
    %v1457 = vadd.f32 %v1433, %v1449
    %v1458 = vld [vmem:[%s173 + $0x80] sm:$0xff]
    %v1459 = vld [vmem:[%s173 + $0x88] sm:$0xff]
    %v1460 = vld [vmem:[%s173 + $0x90] sm:$0xff]
    %v1461 = vld [vmem:[%s173 + $0x98] sm:$0xff]
    %v1462 = vld [vmem:[%s173 + $0xa0] sm:$0xff]
    %v1463 = vld [vmem:[%s173 + $0xa8] sm:$0xff]
    %v1464 = vld [vmem:[%s173 + $0xb0] sm:$0xff]
    %v1465 = vld [vmem:[%s173 + $0xb8] sm:$0xff]
    %v1466 = vmul.f32 %v1013, %v1458
    %v1467 = vmul.f32 %v1013, %v1459
    %v1468 = vmul.f32 %v1013, %v1460
    %v1469 = vmul.f32 %v1013, %v1461
    %v1470 = vmul.f32 %v1013, %v1462
    %v1471 = vmul.f32 %v1013, %v1463
    %v1472 = vmul.f32 %v1013, %v1464
    %v1473 = vmul.f32 %v1013, %v1465
    %v1474 = vadd.f32 %v1450, %v1466
    %v1475 = vadd.f32 %v1451, %v1467
    %v1476 = vadd.f32 %v1452, %v1468
    %v1477 = vadd.f32 %v1453, %v1469
    %v1478 = vadd.f32 %v1454, %v1470
    %v1479 = vadd.f32 %v1455, %v1471
    %v1480 = vadd.f32 %v1456, %v1472
    %v1481 = vadd.f32 %v1457, %v1473
    %v1482 = vld [vmem:[%s199 + $0x80] sm:$0xff]
    %v1483 = vld [vmem:[%s199 + $0x88] sm:$0xff]
    %v1484 = vld [vmem:[%s199 + $0x90] sm:$0xff]
    %v1485 = vld [vmem:[%s199 + $0x98] sm:$0xff]
    %v1486 = vld [vmem:[%s199 + $0xa0] sm:$0xff]
    %v1487 = vld [vmem:[%s199 + $0xa8] sm:$0xff]
    %v1488 = vld [vmem:[%s199 + $0xb0] sm:$0xff]
    %v1489 = vld [vmem:[%s199 + $0xb8] sm:$0xff]
    %v1490 = vmul.f32 %v1038, %v1482
    %v1491 = vmul.f32 %v1038, %v1483
    %v1492 = vmul.f32 %v1038, %v1484
    %v1493 = vmul.f32 %v1038, %v1485
    %v1494 = vmul.f32 %v1038, %v1486
    %v1495 = vmul.f32 %v1038, %v1487
    %v1496 = vmul.f32 %v1038, %v1488
    %v1497 = vmul.f32 %v1038, %v1489
    %v1498 = vadd.f32 %v1474, %v1490
    %v1499 = vadd.f32 %v1475, %v1491
    %v1500 = vadd.f32 %v1476, %v1492
    %v1501 = vadd.f32 %v1477, %v1493
    %v1502 = vadd.f32 %v1478, %v1494
    %v1503 = vadd.f32 %v1479, %v1495
    %v1504 = vadd.f32 %v1480, %v1496
    %v1505 = vadd.f32 %v1481, %v1497
    %v1506 = vld [vmem:[%s225 + $0x80] sm:$0xff]
    %v1507 = vld [vmem:[%s225 + $0x88] sm:$0xff]
    %v1508 = vld [vmem:[%s225 + $0x90] sm:$0xff]
    %v1509 = vld [vmem:[%s225 + $0x98] sm:$0xff]
    %v1510 = vld [vmem:[%s225 + $0xa0] sm:$0xff]
    %v1511 = vld [vmem:[%s225 + $0xa8] sm:$0xff]
    %v1512 = vld [vmem:[%s225 + $0xb0] sm:$0xff]
    %v1513 = vld [vmem:[%s225 + $0xb8] sm:$0xff]
    %v1514 = vmul.f32 %v1063, %v1506
    %v1515 = vmul.f32 %v1063, %v1507
    %v1516 = vmul.f32 %v1063, %v1508
    %v1517 = vmul.f32 %v1063, %v1509
    %v1518 = vmul.f32 %v1063, %v1510
    %v1519 = vmul.f32 %v1063, %v1511
    %v1520 = vmul.f32 %v1063, %v1512
    %v1521 = vmul.f32 %v1063, %v1513
    %v1522 = vadd.f32 %v1498, %v1514
    %v1523 = vadd.f32 %v1499, %v1515
    %v1524 = vadd.f32 %v1500, %v1516
    %v1525 = vadd.f32 %v1501, %v1517
    %v1526 = vadd.f32 %v1502, %v1518
    %v1527 = vadd.f32 %v1503, %v1519
    %v1528 = vadd.f32 %v1504, %v1520
    %v1529 = vadd.f32 %v1505, %v1521
    %v1530 = vld [vmem:[%s251 + $0x80] sm:$0xff]
    %v1531 = vld [vmem:[%s251 + $0x88] sm:$0xff]
    %v1532 = vld [vmem:[%s251 + $0x90] sm:$0xff]
    %v1533 = vld [vmem:[%s251 + $0x98] sm:$0xff]
    %v1534 = vld [vmem:[%s251 + $0xa0] sm:$0xff]
    %v1535 = vld [vmem:[%s251 + $0xa8] sm:$0xff]
    %v1536 = vld [vmem:[%s251 + $0xb0] sm:$0xff]
    %v1537 = vld [vmem:[%s251 + $0xb8] sm:$0xff]
    %v1538 = vmul.f32 %v1088, %v1530
    %v1539 = vmul.f32 %v1088, %v1531
    %v1540 = vmul.f32 %v1088, %v1532
    %v1541 = vmul.f32 %v1088, %v1533
    %v1542 = vmul.f32 %v1088, %v1534
    %v1543 = vmul.f32 %v1088, %v1535
    %v1544 = vmul.f32 %v1088, %v1536
    %v1545 = vmul.f32 %v1088, %v1537
    %v1546 = vadd.f32 %v1522, %v1538
    %v1547 = vadd.f32 %v1523, %v1539
    %v1548 = vadd.f32 %v1524, %v1540
    %v1549 = vadd.f32 %v1525, %v1541
    %v1550 = vadd.f32 %v1526, %v1542
    %v1551 = vadd.f32 %v1527, %v1543
    %v1552 = vadd.f32 %v1528, %v1544
    %v1553 = vadd.f32 %v1529, %v1545
    %v1554 = vmax.f32 %v1546, 0.0
    %v1555 = vmax.f32 %v1547, 0.0
    %v1556 = vmax.f32 %v1548, 0.0
    %v1557 = vmax.f32 %v1549, 0.0
    %v1558 = vmax.f32 %v1550, 0.0
    %v1559 = vmax.f32 %v1551, 0.0
    %v1560 = vmax.f32 %v1552, 0.0
    %v1561 = vmax.f32 %v1553, 0.0
    %v1562 = vmin.f32 %v1554, 1.0
    %v1563 = vmin.f32 %v1555, 1.0
    %v1564 = vmin.f32 %v1556, 1.0
    %v1565 = vmin.f32 %v1557, 1.0
    %v1566 = vmin.f32 %v1558, 1.0
    %v1567 = vmin.f32 %v1559, 1.0
    %v1568 = vmin.f32 %v1560, 1.0
    %v1569 = vmin.f32 %v1561, 1.0
    %1570 = vst [vmem:[%s1121 + $0x80] sm:$0xff] %v1562
    %1571 = vst [vmem:[%s1121 + $0x88] sm:$0xff] %v1563
    %1572 = vst [vmem:[%s1121 + $0x90] sm:$0xff] %v1564
    %1573 = vst [vmem:[%s1121 + $0x98] sm:$0xff] %v1565
    %1574 = vst [vmem:[%s1121 + $0xa0] sm:$0xff] %v1566
    %1575 = vst [vmem:[%s1121 + $0xa8] sm:$0xff] %v1567
    %1576 = vst [vmem:[%s1121 + $0xb0] sm:$0xff] %v1568
    %1577 = vst [vmem:[%s1121 + $0xb8] sm:$0xff] %v1569
    %v1578 = vld [vmem:[#allocation7 + $0xc0] sm:$0xff]
    %v1579 = vld [vmem:[#allocation7 + $0xc8] sm:$0xff]
    %v1580 = vld [vmem:[#allocation7 + $0xd0] sm:$0xff]
    %v1581 = vld [vmem:[#allocation7 + $0xd8] sm:$0xff]
    %v1582 = vld [vmem:[#allocation7 + $0xe0] sm:$0xff]
    %v1583 = vld [vmem:[#allocation6 + $0xc0] sm:$0xff]
    %v1584 = vld [vmem:[#allocation6 + $0xc8] sm:$0xff]
    %v1585 = vld [vmem:[#allocation6 + $0xd0] sm:$0xff]
    %v1586 = vld [vmem:[#allocation6 + $0xd8] sm:$0xff]
    %v1587 = vld [vmem:[#allocation6 + $0xe0] sm:$0xff]
    %v1588 = vmul.f32 %v913, %v1583
    %v1589 = vmul.f32 %v913, %v1584
    %v1590 = vmul.f32 %v913, %v1585
    %v1591 = vmul.f32 %v913, %v1586
    %v1592 = vmul.f32 %v913, %v1587
    %v1593 = vadd.f32 %v1578, %v1588
    %v1594 = vadd.f32 %v1579, %v1589
    %v1595 = vadd.f32 %v1580, %v1590
    %v1596 = vadd.f32 %v1581, %v1591
    %v1597 = vadd.f32 %v1582, %v1592
    %v1598 = vld [vmem:[%s95 + $0xc0] sm:$0xff]
    %v1599 = vld [vmem:[%s95 + $0xc8] sm:$0xff]
    %v1600 = vld [vmem:[%s95 + $0xd0] sm:$0xff]
    %v1601 = vld [vmem:[%s95 + $0xd8] sm:$0xff]
    %v1602 = vld [vmem:[%s95 + $0xe0] sm:$0xff]
    %v1603 = vmul.f32 %v938, %v1598
    %v1604 = vmul.f32 %v938, %v1599
    %v1605 = vmul.f32 %v938, %v1600
    %v1606 = vmul.f32 %v938, %v1601
    %v1607 = vmul.f32 %v938, %v1602
    %v1608 = vadd.f32 %v1593, %v1603
    %v1609 = vadd.f32 %v1594, %v1604
    %v1610 = vadd.f32 %v1595, %v1605
    %v1611 = vadd.f32 %v1596, %v1606
    %v1612 = vadd.f32 %v1597, %v1607
    %v1613 = vld [vmem:[%s121 + $0xc0] sm:$0xff]
    %v1614 = vld [vmem:[%s121 + $0xc8] sm:$0xff]
    %v1615 = vld [vmem:[%s121 + $0xd0] sm:$0xff]
    %v1616 = vld [vmem:[%s121 + $0xd8] sm:$0xff]
    %v1617 = vld [vmem:[%s121 + $0xe0] sm:$0xff]
    %v1618 = vmul.f32 %v963, %v1613
    %v1619 = vmul.f32 %v963, %v1614
    %v1620 = vmul.f32 %v963, %v1615
    %v1621 = vmul.f32 %v963, %v1616
    %v1622 = vmul.f32 %v963, %v1617
    %v1623 = vadd.f32 %v1608, %v1618
    %v1624 = vadd.f32 %v1609, %v1619
    %v1625 = vadd.f32 %v1610, %v1620
    %v1626 = vadd.f32 %v1611, %v1621
    %v1627 = vadd.f32 %v1612, %v1622
    %v1628 = vld [vmem:[%s147 + $0xc0] sm:$0xff]
    %v1629 = vld [vmem:[%s147 + $0xc8] sm:$0xff]
    %v1630 = vld [vmem:[%s147 + $0xd0] sm:$0xff]
    %v1631 = vld [vmem:[%s147 + $0xd8] sm:$0xff]
    %v1632 = vld [vmem:[%s147 + $0xe0] sm:$0xff]
    %v1633 = vmul.f32 %v988, %v1628
    %v1634 = vmul.f32 %v988, %v1629
    %v1635 = vmul.f32 %v988, %v1630
    %v1636 = vmul.f32 %v988, %v1631
    %v1637 = vmul.f32 %v988, %v1632
    %v1638 = vadd.f32 %v1623, %v1633
    %v1639 = vadd.f32 %v1624, %v1634
    %v1640 = vadd.f32 %v1625, %v1635
    %v1641 = vadd.f32 %v1626, %v1636
    %v1642 = vadd.f32 %v1627, %v1637
    %v1643 = vld [vmem:[%s173 + $0xc0] sm:$0xff]
    %v1644 = vld [vmem:[%s173 + $0xc8] sm:$0xff]
    %v1645 = vld [vmem:[%s173 + $0xd0] sm:$0xff]
    %v1646 = vld [vmem:[%s173 + $0xd8] sm:$0xff]
    %v1647 = vld [vmem:[%s173 + $0xe0] sm:$0xff]
    %v1648 = vmul.f32 %v1013, %v1643
    %v1649 = vmul.f32 %v1013, %v1644
    %v1650 = vmul.f32 %v1013, %v1645
    %v1651 = vmul.f32 %v1013, %v1646
    %v1652 = vmul.f32 %v1013, %v1647
    %v1653 = vadd.f32 %v1638, %v1648
    %v1654 = vadd.f32 %v1639, %v1649
    %v1655 = vadd.f32 %v1640, %v1650
    %v1656 = vadd.f32 %v1641, %v1651
    %v1657 = vadd.f32 %v1642, %v1652
    %v1658 = vld [vmem:[%s199 + $0xc0] sm:$0xff]
    %v1659 = vld [vmem:[%s199 + $0xc8] sm:$0xff]
    %v1660 = vld [vmem:[%s199 + $0xd0] sm:$0xff]
    %v1661 = vld [vmem:[%s199 + $0xd8] sm:$0xff]
    %v1662 = vld [vmem:[%s199 + $0xe0] sm:$0xff]
    %v1663 = vmul.f32 %v1038, %v1658
    %v1664 = vmul.f32 %v1038, %v1659
    %v1665 = vmul.f32 %v1038, %v1660
    %v1666 = vmul.f32 %v1038, %v1661
    %v1667 = vmul.f32 %v1038, %v1662
    %v1668 = vadd.f32 %v1653, %v1663
    %v1669 = vadd.f32 %v1654, %v1664
    %v1670 = vadd.f32 %v1655, %v1665
    %v1671 = vadd.f32 %v1656, %v1666
    %v1672 = vadd.f32 %v1657, %v1667
    %v1673 = vld [vmem:[%s225 + $0xc0] sm:$0xff]
    %v1674 = vld [vmem:[%s225 + $0xc8] sm:$0xff]
    %v1675 = vld [vmem:[%s225 + $0xd0] sm:$0xff]
    %v1676 = vld [vmem:[%s225 + $0xd8] sm:$0xff]
    %v1677 = vld [vmem:[%s225 + $0xe0] sm:$0xff]
    %v1678 = vmul.f32 %v1063, %v1673
    %v1679 = vmul.f32 %v1063, %v1674
    %v1680 = vmul.f32 %v1063, %v1675
    %v1681 = vmul.f32 %v1063, %v1676
    %v1682 = vmul.f32 %v1063, %v1677
    %v1683 = vadd.f32 %v1668, %v1678
    %v1684 = vadd.f32 %v1669, %v1679
    %v1685 = vadd.f32 %v1670, %v1680
    %v1686 = vadd.f32 %v1671, %v1681
    %v1687 = vadd.f32 %v1672, %v1682
    %v1688 = vld [vmem:[%s251 + $0xc0] sm:$0xff]
    %v1689 = vld [vmem:[%s251 + $0xc8] sm:$0xff]
    %v1690 = vld [vmem:[%s251 + $0xd0] sm:$0xff]
    %v1691 = vld [vmem:[%s251 + $0xd8] sm:$0xff]
    %v1692 = vld [vmem:[%s251 + $0xe0] sm:$0xff]
    %v1693 = vmul.f32 %v1088, %v1688
    %v1694 = vmul.f32 %v1088, %v1689
    %v1695 = vmul.f32 %v1088, %v1690
    %v1696 = vmul.f32 %v1088, %v1691
    %v1697 = vmul.f32 %v1088, %v1692
    %v1698 = vadd.f32 %v1683, %v1693
    %v1699 = vadd.f32 %v1684, %v1694
    %v1700 = vadd.f32 %v1685, %v1695
    %v1701 = vadd.f32 %v1686, %v1696
    %v1702 = vadd.f32 %v1687, %v1697
    %v1703 = vmax.f32 %v1698, 0.0
    %v1704 = vmax.f32 %v1699, 0.0
    %v1705 = vmax.f32 %v1700, 0.0
    %v1706 = vmax.f32 %v1701, 0.0
    %v1707 = vmax.f32 %v1702, 0.0
    %v1708 = vmin.f32 %v1703, 1.0
    %v1709 = vmin.f32 %v1704, 1.0
    %v1710 = vmin.f32 %v1705, 1.0
    %v1711 = vmin.f32 %v1706, 1.0
    %v1712 = vmin.f32 %v1707, 1.0
    %1713 = vst [vmem:[%s1121 + $0xc0] sm:$0xff] %v1708
    %1714 = vst [vmem:[%s1121 + $0xc8] sm:$0xff] %v1709
    %1715 = vst [vmem:[%s1121 + $0xd0] sm:$0xff] %v1710
    %1716 = vst [vmem:[%s1121 + $0xd8] sm:$0xff] %v1711
    %1717 = vst [vmem:[%s1121 + $0xe0] sm:$0xff] %v1712
    // Predicated region
    $region26: #{tpu_custom_call.1} parent=1 // pred_check
      _
    $region27: #{tpu_custom_call.1} parent=1 // pred_check_branch
      %1719 = sbr.rel (0) target = $region29
    $region28: #{tpu_custom_call.1} parent=1 // pred_region
      %s1721 = ssub.s32 7424, 7424
      %1722 = vsyncadd [#allocation4], %s1721
      %s1723 = sshll.u32 [#allocation9], 4
      %s1724 = int_to_ptr.vmem [resolvable:$true] %s1723
      %1729 = dma.vmem_to_hbm [thread:$0]  %s1724, 7424, %s3, [#allocation4], 128, 128, 8
    $region29: #{tpu_custom_call.1} parent=1 // pred_fallthru
      _
    // Predicated region
    $region30: #{tpu_custom_call.1} parent=1 // pred_check
      _
    $region31: #{tpu_custom_call.1} parent=1 // pred_check_branch
      %1731 = sbr.rel (0) target = $region33
    $region32: #{tpu_custom_call.1} parent=1 // pred_region
      %1732 = dma.done [#allocation4], 7424
    $region33: #{tpu_custom_call.1} parent=1 // pred_fallthru
      _
    %1733 = vsyncpa [#allocation3], 1
    %1734 = vsyncpa [#allocation8], 1
    %1735 = vsyncpa [#allocation4], 1
    %1736 = vsyncpa [#allocation5], 1

</llo_original>
